<compile_context>
chip_gen: v5e
topology: v5e:2x2
jax: 0.10.0
libtpu: 0.0.40
codegen_flags: <defaults>
</compile_context>

<pallas_src>
import functools

import jax
import jax.numpy as jnp
from jax.experimental import pallas as pl
from jax.experimental.pallas import tpu as pltpu


def _slab_layout(Cin, C):
    """Row offsets (multiples of 8) for the packed weight slab, lanes = 3*C."""
    r8 = lambda v: ((v + 7) // 8) * 8
    offs = {}
    row = 0

    def add(name, rows):
        nonlocal row
        offs[name] = row
        row = r8(row + rows)

    add("Wg", Cin)       # (Cin, 3C)  fused gate conv weights [Wg_z | Wg_r | Wg_h]
    add("Weff", Cin)     # (Cin, C)   W1@W2@W3@W4@W5 (folded stacked GCN)
    add("Lc", 3 * C)     # (3C, 3C)   block-diag [Wlc_z, Wlc_r, Wlc_h]
    add("Lhzr", C)       # (C, 2C)    [Wlh_z | Wlh_r]
    add("Wlhh", C)       # (C, C)     Wlh_h
    add("bg", 1)         # (1, 3C)
    add("blzr", 1)       # (1, 2C)
    add("blh", 1)        # (1, C)
    return offs, row, 3 * C


def conv_stacked_a3tgcn_kernel(
    x_ref,       # (R, Cin)   VMEM, R = P*N, period-major rows (row p*N + n)
    aa_ref,      # (2N, N)    VMEM, [A_hat ; A_hat^5]
    w_ref,       # (rows, 3C) VMEM, packed weight/bias slab
    beff_ref,    # (R, C)     VMEM, propagated stacked-GCN bias, tiled over periods
    probs_ref,   # (P,)       SMEM, softmax(attention)
    out_ref,     # (N, C)     VMEM
    ax_s,        # (R, Cin)   VMEM scratch: per-period A   @ X_p
    a5x_s,       # (R, Cin)   VMEM scratch: per-period A^5 @ X_p
    *, N, P, Cin, C, offs,
):
    f32 = jnp.float32
    AA = aa_ref[...]                                              # (2N, N)

    # --- per-period graph aggregation with the *small* normalized adjacency.
    # One (2N, N) @ (N, Cin) matmul per period gives [A X_p ; A^5 X_p];
    # results land in sublane-aligned row blocks of the scratch buffers.
    for p in range(P):
        xp = x_ref[p * N:(p + 1) * N, :]                          # (N, Cin)
        yp = jnp.dot(AA, xp, preferred_element_type=f32)          # (2N, Cin)
        ax_s[p * N:(p + 1) * N, :] = yp[:N, :]
        a5x_s[p * N:(p + 1) * N, :] = yp[N:, :]

    AX = ax_s[...]                                                # (R, Cin)
    A5X = a5x_s[...]                                              # (R, Cin)

    # --- static slices of the packed weight slab.
    Wg = w_ref[offs["Wg"]:offs["Wg"] + Cin, 0:3 * C]              # (Cin, 3C)
    Weff = w_ref[offs["Weff"]:offs["Weff"] + Cin, 0:C]            # (Cin, C)
    Lc = w_ref[offs["Lc"]:offs["Lc"] + 3 * C, 0:3 * C]            # (3C, 3C)
    Lhzr = w_ref[offs["Lhzr"]:offs["Lhzr"] + C, 0:2 * C]          # (C, 2C)
    Wlhh = w_ref[offs["Wlhh"]:offs["Wlhh"] + C, 0:C]              # (C, C)
    bg = w_ref[offs["bg"]:offs["bg"] + 1, 0:3 * C]                # (1, 3C)
    blzr = w_ref[offs["blzr"]:offs["blzr"] + 1, 0:2 * C]          # (1, 2C)
    blh = w_ref[offs["blh"]:offs["blh"] + 1, 0:C]                 # (1, C)

    # --- folded 5-layer stacked GCN: H = (A^5 X) Weff + Beff.
    H = jnp.dot(A5X, Weff, preferred_element_type=f32) + beff_ref[...]   # (R, C)

    # --- all three TGCN gate GCNConvs in one matmul: CG = [cz | cr | ch].
    CG = jnp.dot(AX, Wg, preferred_element_type=f32) + bg                # (R, 3C)

    # --- fused CG consumers: CGL = [cz@Wlc_z | cr@Wlc_r | ch@Wlc_h].
    CGL = jnp.dot(CG, Lc, preferred_element_type=f32)                    # (R, 3C)

    # update + reset gates.
    ZR = jax.nn.sigmoid(
        CGL[:, :2 * C]
        + jnp.dot(H, Lhzr, preferred_element_type=f32)
        + blzr)                                                          # (R, 2C)
    Z = ZR[:, :C]
    Rg = ZR[:, C:]

    # candidate state.
    Ht = jnp.tanh(
        CGL[:, 2 * C:]
        + jnp.dot(H * Rg, Wlhh, preferred_element_type=f32)
        + blh)                                                           # (R, C)

    Hn = Z * H + (1.0 - Z) * Ht                                          # (R, C)

    # --- softmax(attention)-weighted sum over periods (scalars from SMEM,
    # sublane-aligned row-block reduction on the VPU; no extra matmul/DMA).
    acc = probs_ref[0] * Hn[0:N, :]
    for p in range(1, P):
        acc = acc + probs_ref[p] * Hn[p * N:(p + 1) * N, :]
    out_ref[...] = acc                                                   # (N, C)


def build_a_hat(edge_index, edge_weight, num_nodes, improved=False):
    """Dense symmetric-normalized adjacency (gcn_norm with self-loops)."""
    fill = 2.0 if improved else 1.0
    A = jnp.zeros((num_nodes, num_nodes), jnp.float32)
    A = A.at[edge_index[1], edge_index[0]].add(edge_weight)  # A[dst, src] += w
    A = A + fill * jnp.eye(num_nodes, dtype=jnp.float32)
    deg = A.sum(axis=1)
    dinv = jnp.where(deg > 0, 1.0 / jnp.sqrt(deg), 0.0)
    return dinv[:, None] * A * dinv[None, :]


def conv_stacked_a3tgcn(X, A_hat, params):
    """X: [N, Cin, P] float32.  Returns H_accum [N, Cout]."""
    N, Cin, P = X.shape
    C = params["W1"].shape[1]
    R = P * N
    assert N % 8 == 0, "N must be a multiple of 8 for sublane-aligned blocks"

    f32 = jnp.float32
    A_hat = A_hat.astype(f32)

    # ---- parameter folding / fusion (cheap, jittable wrapper math) --------
    A2 = A_hat @ A_hat
    A5 = A2 @ A2 @ A_hat
    AA = jnp.concatenate([A_hat, A5], axis=0)                  # (2N, N)

    # Fold the 5 stacked GCNConv layers (all linear in x).
    Weff = params["W1"].astype(f32)
    Beff = jnp.broadcast_to(params["b1"], (N, C)).astype(f32)
    for i in range(4):
        Beff = A_hat @ (Beff @ params["Wst"][i]) + params["bst"][i]
        Weff = Weff @ params["Wst"][i]
    Beff_rows = jnp.tile(Beff, (P, 1))                         # (R, C)

    # Fuse the three gate GCNConv weights / biases.
    Wg_all = jnp.concatenate([params["Wg"][0], params["Wg"][1], params["Wg"][2]], axis=1)
    bg_all = jnp.concatenate([params["bg"][0], params["bg"][1], params["bg"][2]], axis=1)

    # Fused CG-consumer: block-diag of the three conv-side linear weights.
    Lc_all = jnp.zeros((3 * C, 3 * C), f32)
    Lc_all = Lc_all.at[0:C, 0:C].set(params["Wlc"][0])
    Lc_all = Lc_all.at[C:2 * C, C:2 * C].set(params["Wlc"][1])
    Lc_all = Lc_all.at[2 * C:, 2 * C:].set(params["Wlc"][2])
    Lhzr = jnp.concatenate([params["Wlh"][0], params["Wlh"][1]], axis=1)
    blzr = jnp.concatenate([params["bl"][0], params["bl"][1]], axis=1)
    Wlhh = params["Wlh"][2]
    blh = params["bl"][2]

    probs = jax.nn.softmax(params["attention"].astype(f32))     # (P,)

    # X: (N, Cin, P) -> period-major rows (R, Cin).
    X_rows = jnp.transpose(X, (2, 0, 1)).astype(f32).reshape(R, Cin)

    # Pack all small weights/biases into one lane-padded slab (single DMA).
    offs, slab_rows, slab_lanes = _slab_layout(Cin, C)
    slab = jnp.zeros((slab_rows, slab_lanes), f32)
    slab = slab.at[offs["Wg"]:offs["Wg"] + Cin, 0:3 * C].set(Wg_all)
    slab = slab.at[offs["Weff"]:offs["Weff"] + Cin, 0:C].set(Weff)
    slab = slab.at[offs["Lc"]:offs["Lc"] + 3 * C, 0:3 * C].set(Lc_all)
    slab = slab.at[offs["Lhzr"]:offs["Lhzr"] + C, 0:2 * C].set(Lhzr)
    slab = slab.at[offs["Wlhh"]:offs["Wlhh"] + C, 0:C].set(Wlhh)
    slab = slab.at[offs["bg"]:offs["bg"] + 1, 0:3 * C].set(bg_all)
    slab = slab.at[offs["blzr"]:offs["blzr"] + 1, 0:2 * C].set(blzr)
    slab = slab.at[offs["blh"]:offs["blh"] + 1, 0:C].set(blh)

    kernel = functools.partial(
        conv_stacked_a3tgcn_kernel, N=N, P=P, Cin=Cin, C=C, offs=offs)

    # Single grid-less invocation: everything resident, no chunking.
    return pl.pallas_call(
        kernel,
        out_shape=jax.ShapeDtypeStruct((N, C), f32),
        in_specs=[
            pl.BlockSpec(memory_space=pltpu.MemorySpace.VMEM),   # X_rows
            pl.BlockSpec(memory_space=pltpu.MemorySpace.VMEM),   # [A; A^5]
            pl.BlockSpec(memory_space=pltpu.MemorySpace.VMEM),   # weight slab
            pl.BlockSpec(memory_space=pltpu.MemorySpace.VMEM),   # Beff_rows
            pl.BlockSpec(memory_space=pltpu.MemorySpace.SMEM),   # probs
        ],
        out_specs=pl.BlockSpec(memory_space=pltpu.MemorySpace.VMEM),
        scratch_shapes=[
            pltpu.VMEM((R, Cin), f32),                           # A   X rows
            pltpu.VMEM((R, Cin), f32),                           # A^5 X rows
        ],
    )(X_rows, AA, slab, Beff_rows, probs)


def reference(X, A_hat, params):
    """Pure-JAX reference mirroring the PyTorch forward (unfolded, per-period)."""
    probs = jax.nn.softmax(params["attention"])
    gcn = lambda x, W, b: A_hat @ (x @ W) + b
    H_acc = jnp.zeros((X.shape[0], params["W1"].shape[1]), jnp.float32)
    for p in range(X.shape[2]):
        x = X[:, :, p]
        h = gcn(x, params["W1"], params["b1"])
        for i in range(4):
            h = gcn(h, params["Wst"][i], params["bst"][i])
        H = h
        cz = gcn(x, params["Wg"][0], params["bg"][0])
        Z = jax.nn.sigmoid(cz @ params["Wlc"][0] + H @ params["Wlh"][0] + params["bl"][0])
        cr = gcn(x, params["Wg"][1], params["bg"][1])
        R = jax.nn.sigmoid(cr @ params["Wlc"][1] + H @ params["Wlh"][1] + params["bl"][1])
        ch = gcn(x, params["Wg"][2], params["bg"][2])
        Ht = jnp.tanh(ch @ params["Wlc"][2] + (H * R) @ params["Wlh"][2] + params["bl"][2])
        H_acc = H_acc + probs[p] * (Z * H + (1.0 - Z) * Ht)
    return H_acc


def init_params(key, in_channels, out_channels, periods):
    ks = jax.random.split(key, 12)
    s = 0.1
    return {
        "attention": jax.random.uniform(ks[0], (periods,), jnp.float32),
        "W1":  s * jax.random.normal(ks[1], (in_channels, out_channels), jnp.float32),
        "b1":  s * jax.random.normal(ks[2], (1, out_channels), jnp.float32),
        "Wst": s * jax.random.normal(ks[3], (4, out_channels, out_channels), jnp.float32),
        "bst": s * jax.random.normal(ks[4], (4, 1, out_channels), jnp.float32),
        "Wg":  s * jax.random.normal(ks[5], (3, in_channels, out_channels), jnp.float32),
        "bg":  s * jax.random.normal(ks[6], (3, 1, out_channels), jnp.float32),
        "Wlc": s * jax.random.normal(ks[7], (3, out_channels, out_channels), jnp.float32),
        "Wlh": s * jax.random.normal(ks[8], (3, out_channels, out_channels), jnp.float32),
        "bl":  s * jax.random.normal(ks[9], (3, 1, out_channels), jnp.float32),
        # TODO(synk): self.linear = nn.Linear(512*5, 512) is never used in forward; omitted.
    }


if __name__ == "__main__":
    N, Cin, Cout, P, E = 16, 4, 32, 8, 48

    key = jax.random.PRNGKey(0)
    kx, ke, kw, kp = jax.random.split(key, 4)

    X = jax.random.normal(kx, (N, Cin, P), jnp.float32)
    edge_index = jax.random.randint(ke, (2, E), 0, N, jnp.int32)
    edge_weight = jax.random.uniform(kw, (E,), jnp.float32, 0.1, 1.0)
    params = init_params(kp, Cin, Cout, P)

    A_hat = build_a_hat(edge_index, edge_weight, N, improved=False)

    out = jax.block_until_ready(jax.jit(conv_stacked_a3tgcn)(X, A_hat, params))
    ref = reference(X, A_hat, params)

    assert out.shape == (N, Cout)
    rel_err = float(jnp.max(jnp.abs(out - ref)) / (jnp.max(jnp.abs(ref)) + 1e-12))
    assert rel_err < 1e-2, f"mismatch vs JAX reference (rel err {rel_err})"

    print("KERNEL_OK")
</pallas_src>

<mosaic_0001>
module attributes {stable_mosaic.version = 11 : i64} {
  func.func @conv_stacked_a3tgcn_kernel(%arg0: memref<128x4xf32, #tpu.memory_space<vmem>>, %arg1: memref<32x16xf32, #tpu.memory_space<vmem>>, %arg2: memref<200x96xf32, #tpu.memory_space<vmem>>, %arg3: memref<128x32xf32, #tpu.memory_space<vmem>>, %arg4: memref<8xf32, #tpu.memory_space<smem>>, %arg5: memref<16x32xf32, #tpu.memory_space<vmem>>, %arg6: memref<128x4xf32, #tpu.memory_space<vmem>>, %arg7: memref<128x4xf32, #tpu.memory_space<vmem>>) attributes {dimension_semantics = [], scalar_prefetch = 0 : i64, scratch_operands = 2 : i64, tpu.core_type = #tpu.core_type<tc>} {
    %c0 = arith.constant 0 : index
    %c0_0 = arith.constant 0 : index
    %0 = vector.load %arg1[%c0, %c0_0] : memref<32x16xf32, #tpu.memory_space<vmem>>, vector<32x16xf32>
    %c0_1 = arith.constant 0 : index
    %c0_2 = arith.constant 0 : index
    %1 = vector.load %arg0[%c0_1, %c0_2] : memref<128x4xf32, #tpu.memory_space<vmem>>, vector<16x4xf32>
    %cst = arith.constant dense<0.000000e+00> : vector<32x4xf32>
    %2 = tpu.matmul %0, %1, %cst {dimension_numbers = #tpu.dot_dimension_numbers<[1], [0], [0], [1], [0, 0, 1, 1], [], []>} : vector<32x16xf32>, vector<16x4xf32>, vector<32x4xf32> -> vector<32x4xf32>
    %3 = vector.extract_strided_slice %2 {offsets = [0, 0], sizes = [16, 4], strides = [1, 1]} : vector<32x4xf32> to vector<16x4xf32>
    %c0_3 = arith.constant 0 : index
    %c0_4 = arith.constant 0 : index
    %4 = vector.load %arg6[%c0_3, %c0_4] : memref<128x4xf32, #tpu.memory_space<vmem>>, vector<16x4xf32>
    tpu.vector_store %arg6[%c0_3, %c0_4], %3 {strides = array<i32>} : memref<128x4xf32, #tpu.memory_space<vmem>>, vector<16x4xf32>,
    %5 = vector.extract_strided_slice %2 {offsets = [16, 0], sizes = [16, 4], strides = [1, 1]} : vector<32x4xf32> to vector<16x4xf32>
    %c0_5 = arith.constant 0 : index
    %c0_6 = arith.constant 0 : index
    %6 = vector.load %arg7[%c0_5, %c0_6] : memref<128x4xf32, #tpu.memory_space<vmem>>, vector<16x4xf32>
    tpu.vector_store %arg7[%c0_5, %c0_6], %5 {strides = array<i32>} : memref<128x4xf32, #tpu.memory_space<vmem>>, vector<16x4xf32>,
    %c16 = arith.constant 16 : index
    %c0_7 = arith.constant 0 : index
    %7 = vector.load %arg0[%c16, %c0_7] : memref<128x4xf32, #tpu.memory_space<vmem>>, vector<16x4xf32>
    %cst_8 = arith.constant dense<0.000000e+00> : vector<32x4xf32>
    %8 = tpu.matmul %0, %7, %cst_8 {dimension_numbers = #tpu.dot_dimension_numbers<[1], [0], [0], [1], [0, 0, 1, 1], [], []>} : vector<32x16xf32>, vector<16x4xf32>, vector<32x4xf32> -> vector<32x4xf32>
    %9 = vector.extract_strided_slice %8 {offsets = [0, 0], sizes = [16, 4], strides = [1, 1]} : vector<32x4xf32> to vector<16x4xf32>
    %c16_9 = arith.constant 16 : index
    %c0_10 = arith.constant 0 : index
    %10 = vector.load %arg6[%c16_9, %c0_10] : memref<128x4xf32, #tpu.memory_space<vmem>>, vector<16x4xf32>
    tpu.vector_store %arg6[%c16_9, %c0_10], %9 {strides = array<i32>} : memref<128x4xf32, #tpu.memory_space<vmem>>, vector<16x4xf32>,
    %11 = vector.extract_strided_slice %8 {offsets = [16, 0], sizes = [16, 4], strides = [1, 1]} : vector<32x4xf32> to vector<16x4xf32>
    %c16_11 = arith.constant 16 : index
    %c0_12 = arith.constant 0 : index
    %12 = vector.load %arg7[%c16_11, %c0_12] : memref<128x4xf32, #tpu.memory_space<vmem>>, vector<16x4xf32>
    tpu.vector_store %arg7[%c16_11, %c0_12], %11 {strides = array<i32>} : memref<128x4xf32, #tpu.memory_space<vmem>>, vector<16x4xf32>,
    %c32 = arith.constant 32 : index
    %c0_13 = arith.constant 0 : index
    %13 = vector.load %arg0[%c32, %c0_13] : memref<128x4xf32, #tpu.memory_space<vmem>>, vector<16x4xf32>
    %cst_14 = arith.constant dense<0.000000e+00> : vector<32x4xf32>
    %14 = tpu.matmul %0, %13, %cst_14 {dimension_numbers = #tpu.dot_dimension_numbers<[1], [0], [0], [1], [0, 0, 1, 1], [], []>} : vector<32x16xf32>, vector<16x4xf32>, vector<32x4xf32> -> vector<32x4xf32>
    %15 = vector.extract_strided_slice %14 {offsets = [0, 0], sizes = [16, 4], strides = [1, 1]} : vector<32x4xf32> to vector<16x4xf32>
    %c32_15 = arith.constant 32 : index
    %c0_16 = arith.constant 0 : index
    %16 = vector.load %arg6[%c32_15, %c0_16] : memref<128x4xf32, #tpu.memory_space<vmem>>, vector<16x4xf32>
    tpu.vector_store %arg6[%c32_15, %c0_16], %15 {strides = array<i32>} : memref<128x4xf32, #tpu.memory_space<vmem>>, vector<16x4xf32>,
    %17 = vector.extract_strided_slice %14 {offsets = [16, 0], sizes = [16, 4], strides = [1, 1]} : vector<32x4xf32> to vector<16x4xf32>
    %c32_17 = arith.constant 32 : index
    %c0_18 = arith.constant 0 : index
    %18 = vector.load %arg7[%c32_17, %c0_18] : memref<128x4xf32, #tpu.memory_space<vmem>>, vector<16x4xf32>
    tpu.vector_store %arg7[%c32_17, %c0_18], %17 {strides = array<i32>} : memref<128x4xf32, #tpu.memory_space<vmem>>, vector<16x4xf32>,
    %c48 = arith.constant 48 : index
    %c0_19 = arith.constant 0 : index
    %19 = vector.load %arg0[%c48, %c0_19] : memref<128x4xf32, #tpu.memory_space<vmem>>, vector<16x4xf32>
    %cst_20 = arith.constant dense<0.000000e+00> : vector<32x4xf32>
    %20 = tpu.matmul %0, %19, %cst_20 {dimension_numbers = #tpu.dot_dimension_numbers<[1], [0], [0], [1], [0, 0, 1, 1], [], []>} : vector<32x16xf32>, vector<16x4xf32>, vector<32x4xf32> -> vector<32x4xf32>
    %21 = vector.extract_strided_slice %20 {offsets = [0, 0], sizes = [16, 4], strides = [1, 1]} : vector<32x4xf32> to vector<16x4xf32>
    %c48_21 = arith.constant 48 : index
    %c0_22 = arith.constant 0 : index
    %22 = vector.load %arg6[%c48_21, %c0_22] : memref<128x4xf32, #tpu.memory_space<vmem>>, vector<16x4xf32>
    tpu.vector_store %arg6[%c48_21, %c0_22], %21 {strides = array<i32>} : memref<128x4xf32, #tpu.memory_space<vmem>>, vector<16x4xf32>,
    %23 = vector.extract_strided_slice %20 {offsets = [16, 0], sizes = [16, 4], strides = [1, 1]} : vector<32x4xf32> to vector<16x4xf32>
    %c48_23 = arith.constant 48 : index
    %c0_24 = arith.constant 0 : index
    %24 = vector.load %arg7[%c48_23, %c0_24] : memref<128x4xf32, #tpu.memory_space<vmem>>, vector<16x4xf32>
    tpu.vector_store %arg7[%c48_23, %c0_24], %23 {strides = array<i32>} : memref<128x4xf32, #tpu.memory_space<vmem>>, vector<16x4xf32>,
    %c64 = arith.constant 64 : index
    %c0_25 = arith.constant 0 : index
    %25 = vector.load %arg0[%c64, %c0_25] : memref<128x4xf32, #tpu.memory_space<vmem>>, vector<16x4xf32>
    %cst_26 = arith.constant dense<0.000000e+00> : vector<32x4xf32>
    %26 = tpu.matmul %0, %25, %cst_26 {dimension_numbers = #tpu.dot_dimension_numbers<[1], [0], [0], [1], [0, 0, 1, 1], [], []>} : vector<32x16xf32>, vector<16x4xf32>, vector<32x4xf32> -> vector<32x4xf32>
    %27 = vector.extract_strided_slice %26 {offsets = [0, 0], sizes = [16, 4], strides = [1, 1]} : vector<32x4xf32> to vector<16x4xf32>
    %c64_27 = arith.constant 64 : index
    %c0_28 = arith.constant 0 : index
    %28 = vector.load %arg6[%c64_27, %c0_28] : memref<128x4xf32, #tpu.memory_space<vmem>>, vector<16x4xf32>
    tpu.vector_store %arg6[%c64_27, %c0_28], %27 {strides = array<i32>} : memref<128x4xf32, #tpu.memory_space<vmem>>, vector<16x4xf32>,
    %29 = vector.extract_strided_slice %26 {offsets = [16, 0], sizes = [16, 4], strides = [1, 1]} : vector<32x4xf32> to vector<16x4xf32>
    %c64_29 = arith.constant 64 : index
    %c0_30 = arith.constant 0 : index
    %30 = vector.load %arg7[%c64_29, %c0_30] : memref<128x4xf32, #tpu.memory_space<vmem>>, vector<16x4xf32>
    tpu.vector_store %arg7[%c64_29, %c0_30], %29 {strides = array<i32>} : memref<128x4xf32, #tpu.memory_space<vmem>>, vector<16x4xf32>,
    %c80 = arith.constant 80 : index
    %c0_31 = arith.constant 0 : index
    %31 = vector.load %arg0[%c80, %c0_31] : memref<128x4xf32, #tpu.memory_space<vmem>>, vector<16x4xf32>
    %cst_32 = arith.constant dense<0.000000e+00> : vector<32x4xf32>
    %32 = tpu.matmul %0, %31, %cst_32 {dimension_numbers = #tpu.dot_dimension_numbers<[1], [0], [0], [1], [0, 0, 1, 1], [], []>} : vector<32x16xf32>, vector<16x4xf32>, vector<32x4xf32> -> vector<32x4xf32>
    %33 = vector.extract_strided_slice %32 {offsets = [0, 0], sizes = [16, 4], strides = [1, 1]} : vector<32x4xf32> to vector<16x4xf32>
    %c80_33 = arith.constant 80 : index
    %c0_34 = arith.constant 0 : index
    %34 = vector.load %arg6[%c80_33, %c0_34] : memref<128x4xf32, #tpu.memory_space<vmem>>, vector<16x4xf32>
    tpu.vector_store %arg6[%c80_33, %c0_34], %33 {strides = array<i32>} : memref<128x4xf32, #tpu.memory_space<vmem>>, vector<16x4xf32>,
    %35 = vector.extract_strided_slice %32 {offsets = [16, 0], sizes = [16, 4], strides = [1, 1]} : vector<32x4xf32> to vector<16x4xf32>
    %c80_35 = arith.constant 80 : index
    %c0_36 = arith.constant 0 : index
    %36 = vector.load %arg7[%c80_35, %c0_36] : memref<128x4xf32, #tpu.memory_space<vmem>>, vector<16x4xf32>
    tpu.vector_store %arg7[%c80_35, %c0_36], %35 {strides = array<i32>} : memref<128x4xf32, #tpu.memory_space<vmem>>, vector<16x4xf32>,
    %c96 = arith.constant 96 : index
    %c0_37 = arith.constant 0 : index
    %37 = vector.load %arg0[%c96, %c0_37] : memref<128x4xf32, #tpu.memory_space<vmem>>, vector<16x4xf32>
    %cst_38 = arith.constant dense<0.000000e+00> : vector<32x4xf32>
    %38 = tpu.matmul %0, %37, %cst_38 {dimension_numbers = #tpu.dot_dimension_numbers<[1], [0], [0], [1], [0, 0, 1, 1], [], []>} : vector<32x16xf32>, vector<16x4xf32>, vector<32x4xf32> -> vector<32x4xf32>
    %39 = vector.extract_strided_slice %38 {offsets = [0, 0], sizes = [16, 4], strides = [1, 1]} : vector<32x4xf32> to vector<16x4xf32>
    %c96_39 = arith.constant 96 : index
    %c0_40 = arith.constant 0 : index
    %40 = vector.load %arg6[%c96_39, %c0_40] : memref<128x4xf32, #tpu.memory_space<vmem>>, vector<16x4xf32>
    tpu.vector_store %arg6[%c96_39, %c0_40], %39 {strides = array<i32>} : memref<128x4xf32, #tpu.memory_space<vmem>>, vector<16x4xf32>,
    %41 = vector.extract_strided_slice %38 {offsets = [16, 0], sizes = [16, 4], strides = [1, 1]} : vector<32x4xf32> to vector<16x4xf32>
    %c96_41 = arith.constant 96 : index
    %c0_42 = arith.constant 0 : index
    %42 = vector.load %arg7[%c96_41, %c0_42] : memref<128x4xf32, #tpu.memory_space<vmem>>, vector<16x4xf32>
    tpu.vector_store %arg7[%c96_41, %c0_42], %41 {strides = array<i32>} : memref<128x4xf32, #tpu.memory_space<vmem>>, vector<16x4xf32>,
    %c112 = arith.constant 112 : index
    %c0_43 = arith.constant 0 : index
    %43 = vector.load %arg0[%c112, %c0_43] : memref<128x4xf32, #tpu.memory_space<vmem>>, vector<16x4xf32>
    %cst_44 = arith.constant dense<0.000000e+00> : vector<32x4xf32>
    %44 = tpu.matmul %0, %43, %cst_44 {dimension_numbers = #tpu.dot_dimension_numbers<[1], [0], [0], [1], [0, 0, 1, 1], [], []>} : vector<32x16xf32>, vector<16x4xf32>, vector<32x4xf32> -> vector<32x4xf32>
    %45 = vector.extract_strided_slice %44 {offsets = [0, 0], sizes = [16, 4], strides = [1, 1]} : vector<32x4xf32> to vector<16x4xf32>
    %c112_45 = arith.constant 112 : index
    %c0_46 = arith.constant 0 : index
    %46 = vector.load %arg6[%c112_45, %c0_46] : memref<128x4xf32, #tpu.memory_space<vmem>>, vector<16x4xf32>
    tpu.vector_store %arg6[%c112_45, %c0_46], %45 {strides = array<i32>} : memref<128x4xf32, #tpu.memory_space<vmem>>, vector<16x4xf32>,
    %47 = vector.extract_strided_slice %44 {offsets = [16, 0], sizes = [16, 4], strides = [1, 1]} : vector<32x4xf32> to vector<16x4xf32>
    %c112_47 = arith.constant 112 : index
    %c0_48 = arith.constant 0 : index
    %48 = vector.load %arg7[%c112_47, %c0_48] : memref<128x4xf32, #tpu.memory_space<vmem>>, vector<16x4xf32>
    tpu.vector_store %arg7[%c112_47, %c0_48], %47 {strides = array<i32>} : memref<128x4xf32, #tpu.memory_space<vmem>>, vector<16x4xf32>,
    %c0_49 = arith.constant 0 : index
    %c0_50 = arith.constant 0 : index
    %49 = vector.load %arg6[%c0_49, %c0_50] : memref<128x4xf32, #tpu.memory_space<vmem>>, vector<128x4xf32>
    %c0_51 = arith.constant 0 : index
    %c0_52 = arith.constant 0 : index
    %50 = vector.load %arg7[%c0_51, %c0_52] : memref<128x4xf32, #tpu.memory_space<vmem>>, vector<128x4xf32>
    %c0_53 = arith.constant 0 : index
    %c0_54 = arith.constant 0 : index
    %51 = vector.load %arg2[%c0_53, %c0_54] : memref<200x96xf32, #tpu.memory_space<vmem>>, vector<4x96xf32>
    %c8 = arith.constant 8 : index
    %c0_55 = arith.constant 0 : index
    %52 = vector.load %arg2[%c8, %c0_55] : memref<200x96xf32, #tpu.memory_space<vmem>>, vector<4x32xf32>
    %c16_56 = arith.constant 16 : index
    %c0_57 = arith.constant 0 : index
    %53 = vector.load %arg2[%c16_56, %c0_57] : memref<200x96xf32, #tpu.memory_space<vmem>>, vector<96x96xf32>
    %c112_58 = arith.constant 112 : index
    %c0_59 = arith.constant 0 : index
    %54 = vector.load %arg2[%c112_58, %c0_59] : memref<200x96xf32, #tpu.memory_space<vmem>>, vector<32x64xf32>
    %c144 = arith.constant 144 : index
    %c0_60 = arith.constant 0 : index
    %55 = vector.load %arg2[%c144, %c0_60] : memref<200x96xf32, #tpu.memory_space<vmem>>, vector<32x32xf32>
    %c176 = arith.constant 176 : index
    %c0_61 = arith.constant 0 : index
    %56 = vector.load %arg2[%c176, %c0_61] : memref<200x96xf32, #tpu.memory_space<vmem>>, vector<1x96xf32>
    %c184 = arith.constant 184 : index
    %c0_62 = arith.constant 0 : index
    %57 = vector.load %arg2[%c184, %c0_62] : memref<200x96xf32, #tpu.memory_space<vmem>>, vector<1x64xf32>
    %c192 = arith.constant 192 : index
    %c0_63 = arith.constant 0 : index
    %58 = vector.load %arg2[%c192, %c0_63] : memref<200x96xf32, #tpu.memory_space<vmem>>, vector<1x32xf32>
    %cst_64 = arith.constant dense<0.000000e+00> : vector<128x32xf32>
    %59 = tpu.matmul %50, %52, %cst_64 {dimension_numbers = #tpu.dot_dimension_numbers<[1], [0], [0], [1], [0, 0, 1, 1], [], []>} : vector<128x4xf32>, vector<4x32xf32>, vector<128x32xf32> -> vector<128x32xf32>
    %c0_65 = arith.constant 0 : index
    %c0_66 = arith.constant 0 : index
    %60 = vector.load %arg3[%c0_65, %c0_66] : memref<128x32xf32, #tpu.memory_space<vmem>>, vector<128x32xf32>
    %61 = arith.addf %59, %60 : vector<128x32xf32>
    %cst_67 = arith.constant dense<0.000000e+00> : vector<128x96xf32>
    %62 = tpu.matmul %49, %51, %cst_67 {dimension_numbers = #tpu.dot_dimension_numbers<[1], [0], [0], [1], [0, 0, 1, 1], [], []>} : vector<128x4xf32>, vector<4x96xf32>, vector<128x96xf32> -> vector<128x96xf32>
    %63 = vector.broadcast %56 : vector<1x96xf32> to vector<128x96xf32>
    %64 = arith.addf %62, %63 : vector<128x96xf32>
    %cst_68 = arith.constant dense<0.000000e+00> : vector<128x96xf32>
    %65 = tpu.matmul %64, %53, %cst_68 {dimension_numbers = #tpu.dot_dimension_numbers<[1], [0], [0], [1], [0, 0, 1, 1], [], []>} : vector<128x96xf32>, vector<96x96xf32>, vector<128x96xf32> -> vector<128x96xf32>
    %66 = vector.extract_strided_slice %65 {offsets = [0, 0], sizes = [128, 64], strides = [1, 1]} : vector<128x96xf32> to vector<128x64xf32>
    %cst_69 = arith.constant dense<0.000000e+00> : vector<128x64xf32>
    %67 = tpu.matmul %61, %54, %cst_69 {dimension_numbers = #tpu.dot_dimension_numbers<[1], [0], [0], [1], [0, 0, 1, 1], [], []>} : vector<128x32xf32>, vector<32x64xf32>, vector<128x64xf32> -> vector<128x64xf32>
    %68 = arith.addf %66, %67 : vector<128x64xf32>
    %69 = vector.broadcast %57 : vector<1x64xf32> to vector<128x64xf32>
    %70 = arith.addf %68, %69 : vector<128x64xf32>
    %71 = arith.negf %70 : vector<128x64xf32>
    %72 = math.exp %71 : vector<128x64xf32>
    %cst_70 = arith.constant 1.000000e+00 : f32
    %73 = vector.broadcast %cst_70 : f32 to vector<128x64xf32>
    %74 = arith.addf %73, %72 : vector<128x64xf32>
    %75 = arith.divf %73, %74 : vector<128x64xf32>
    %76 = vector.extract_strided_slice %75 {offsets = [0, 0], sizes = [128, 32], strides = [1, 1]} : vector<128x64xf32> to vector<128x32xf32>
    %77 = vector.extract_strided_slice %75 {offsets = [0, 32], sizes = [128, 32], strides = [1, 1]} : vector<128x64xf32> to vector<128x32xf32>
    %78 = vector.extract_strided_slice %65 {offsets = [0, 64], sizes = [128, 32], strides = [1, 1]} : vector<128x96xf32> to vector<128x32xf32>
    %79 = arith.mulf %61, %77 : vector<128x32xf32>
    %cst_71 = arith.constant dense<0.000000e+00> : vector<128x32xf32>
    %80 = tpu.matmul %79, %55, %cst_71 {dimension_numbers = #tpu.dot_dimension_numbers<[1], [0], [0], [1], [0, 0, 1, 1], [], []>} : vector<128x32xf32>, vector<32x32xf32>, vector<128x32xf32> -> vector<128x32xf32>
    %81 = arith.addf %78, %80 : vector<128x32xf32>
    %82 = vector.broadcast %58 : vector<1x32xf32> to vector<128x32xf32>
    %83 = arith.addf %81, %82 : vector<128x32xf32>
    %84 = math.tanh %83 : vector<128x32xf32>
    %85 = arith.mulf %76, %61 : vector<128x32xf32>
    %cst_72 = arith.constant 1.000000e+00 : f32
    %86 = vector.broadcast %cst_72 : f32 to vector<128x32xf32>
    %87 = arith.subf %86, %76 : vector<128x32xf32>
    %88 = arith.mulf %87, %84 : vector<128x32xf32>
    %89 = arith.addf %85, %88 : vector<128x32xf32>
    %c0_73 = arith.constant 0 : index
    %90 = memref.load %arg4[%c0_73] : memref<8xf32, #tpu.memory_space<smem>>
    %91 = vector.extract_strided_slice %89 {offsets = [0, 0], sizes = [16, 32], strides = [1, 1]} : vector<128x32xf32> to vector<16x32xf32>
    %92 = vector.broadcast %90 : f32 to vector<16x32xf32>
    %93 = arith.mulf %92, %91 : vector<16x32xf32>
    %c1 = arith.constant 1 : index
    %94 = memref.load %arg4[%c1] : memref<8xf32, #tpu.memory_space<smem>>
    %95 = vector.extract_strided_slice %89 {offsets = [16, 0], sizes = [16, 32], strides = [1, 1]} : vector<128x32xf32> to vector<16x32xf32>
    %96 = vector.broadcast %94 : f32 to vector<16x32xf32>
    %97 = arith.mulf %96, %95 : vector<16x32xf32>
    %98 = arith.addf %93, %97 : vector<16x32xf32>
    %c2 = arith.constant 2 : index
    %99 = memref.load %arg4[%c2] : memref<8xf32, #tpu.memory_space<smem>>
    %100 = vector.extract_strided_slice %89 {offsets = [32, 0], sizes = [16, 32], strides = [1, 1]} : vector<128x32xf32> to vector<16x32xf32>
    %101 = vector.broadcast %99 : f32 to vector<16x32xf32>
    %102 = arith.mulf %101, %100 : vector<16x32xf32>
    %103 = arith.addf %98, %102 : vector<16x32xf32>
    %c3 = arith.constant 3 : index
    %104 = memref.load %arg4[%c3] : memref<8xf32, #tpu.memory_space<smem>>
    %105 = vector.extract_strided_slice %89 {offsets = [48, 0], sizes = [16, 32], strides = [1, 1]} : vector<128x32xf32> to vector<16x32xf32>
    %106 = vector.broadcast %104 : f32 to vector<16x32xf32>
    %107 = arith.mulf %106, %105 : vector<16x32xf32>
    %108 = arith.addf %103, %107 : vector<16x32xf32>
    %c4 = arith.constant 4 : index
    %109 = memref.load %arg4[%c4] : memref<8xf32, #tpu.memory_space<smem>>
    %110 = vector.extract_strided_slice %89 {offsets = [64, 0], sizes = [16, 32], strides = [1, 1]} : vector<128x32xf32> to vector<16x32xf32>
    %111 = vector.broadcast %109 : f32 to vector<16x32xf32>
    %112 = arith.mulf %111, %110 : vector<16x32xf32>
    %113 = arith.addf %108, %112 : vector<16x32xf32>
    %c5 = arith.constant 5 : index
    %114 = memref.load %arg4[%c5] : memref<8xf32, #tpu.memory_space<smem>>
    %115 = vector.extract_strided_slice %89 {offsets = [80, 0], sizes = [16, 32], strides = [1, 1]} : vector<128x32xf32> to vector<16x32xf32>
    %116 = vector.broadcast %114 : f32 to vector<16x32xf32>
    %117 = arith.mulf %116, %115 : vector<16x32xf32>
    %118 = arith.addf %113, %117 : vector<16x32xf32>
    %c6 = arith.constant 6 : index
    %119 = memref.load %arg4[%c6] : memref<8xf32, #tpu.memory_space<smem>>
    %120 = vector.extract_strided_slice %89 {offsets = [96, 0], sizes = [16, 32], strides = [1, 1]} : vector<128x32xf32> to vector<16x32xf32>
    %121 = vector.broadcast %119 : f32 to vector<16x32xf32>
    %122 = arith.mulf %121, %120 : vector<16x32xf32>
    %123 = arith.addf %118, %122 : vector<16x32xf32>
    %c7 = arith.constant 7 : index
    %124 = memref.load %arg4[%c7] : memref<8xf32, #tpu.memory_space<smem>>
    %125 = vector.extract_strided_slice %89 {offsets = [112, 0], sizes = [16, 32], strides = [1, 1]} : vector<128x32xf32> to vector<16x32xf32>
    %126 = vector.broadcast %124 : f32 to vector<16x32xf32>
    %127 = arith.mulf %126, %125 : vector<16x32xf32>
    %128 = arith.addf %123, %127 : vector<16x32xf32>
    %c0_74 = arith.constant 0 : index
    %c0_75 = arith.constant 0 : index
    %129 = vector.load %arg5[%c0_74, %c0_75] : memref<16x32xf32, #tpu.memory_space<vmem>>, vector<16x32xf32>
    tpu.vector_store %arg5[%c0_74, %c0_75], %128 {strides = array<i32>} : memref<16x32xf32, #tpu.memory_space<vmem>>, vector<16x32xf32>,
    return
  }
}

</mosaic_0001>

<llo_original>
// kernel: conv_stacked_a3tgcn.1
$region0: #{conv_stacked_a3tgcn.1}
  #allocation0 [shape = 'u32[]', space=smem, size = 0x4, offset = 0x4, fixed_abs, tag = 'smem constant byte address 0x4 - core index']
  #allocation1 [shape = 'u32[72,128]{1,0:T(1,128)}', space=vmem, size = 0x9000, scoped, tag = 'internal scratch']
  #allocation2 [shape = 'f32[128,4]{1,0:T(8,128)}', space=vmem, size = 0x10000, scoped, tag = 'scratch operand']
  #allocation3 [shape = 'f32[128,4]{1,0:T(8,128)}', space=vmem, size = 0x10000, scoped, tag = 'scratch operand']
  %s0 = inlined_call_operand.vmem [shape: f32[128,4], index: 0, kind: input, shape index: {}]
  %s1 = inlined_call_operand.vmem [shape: f32[32,16], index: 1, kind: input, shape index: {}]
  %s2 = inlined_call_operand.vmem [shape: f32[200,96], index: 2, kind: input, shape index: {}]
  %s3 = inlined_call_operand.vmem [shape: f32[128,32], index: 3, kind: input, shape index: {}]
  %s4 = inlined_call_operand.vmem [shape: f32[8], index: 4, kind: input, shape index: {}]
  %s5 = inlined_call_operand.hbm [shape: f32[16,32], index: 5, kind: output, shape index: {}]
  %s6 = sld [smem:[#allocation0]]
  $region34: #{conv_stacked_a3tgcn.1} parent=0
    _
  %s8 = ssub.s32 1, %s6
  %s9 = scalar_select 0, %s8, %s6
  $region1: #{conv_stacked_a3tgcn.1} parent=0
    #allocation4 [shape = 'u8[512]{0}', space=smem, size = 0x200, scoped, tag = 'input window, operand 4, single buffered']
    #allocation5 [shape = 's32[1]{0}', space=sflag, size = 0x4, scoped, tag = 'scoped memory for conv_stacked_a3tgcn.1']
    #allocation6 [shape = 's32[1]{0}', space=sflag, size = 0x4, scoped, tag = 'scoped memory for conv_stacked_a3tgcn.1']
    #allocation7 [shape = 'u8[8192]{0}', space=vmem, size = 0x2000, scoped, tag = 'output window, operand 0, single buffered']
    %10 = vsyncpa [#allocation6], 0
    %11 = vsyncpa [#allocation5], 0
    // Predicated region
    $region2: #{conv_stacked_a3tgcn.1} parent=1 // pred_check
      _
    $region3: #{conv_stacked_a3tgcn.1} parent=1 // pred_check_branch
      %13 = sbr.rel (0) target = $region5
    $region4: #{conv_stacked_a3tgcn.1} parent=1 // pred_region
      _
    $region5: #{conv_stacked_a3tgcn.1} parent=1 // pred_fallthru
      _
    // Predicated region
    $region6: #{conv_stacked_a3tgcn.1} parent=1 // pred_check
      _
    $region7: #{conv_stacked_a3tgcn.1} parent=1 // pred_check_branch
      %15 = sbr.rel (0) target = $region9
    $region8: #{conv_stacked_a3tgcn.1} parent=1 // pred_region
      _
    $region9: #{conv_stacked_a3tgcn.1} parent=1 // pred_fallthru
      _
    // Predicated region
    $region10: #{conv_stacked_a3tgcn.1} parent=1 // pred_check
      _
    $region11: #{conv_stacked_a3tgcn.1} parent=1 // pred_check_branch
      %17 = sbr.rel (0) target = $region13
    $region12: #{conv_stacked_a3tgcn.1} parent=1 // pred_region
      _
    $region13: #{conv_stacked_a3tgcn.1} parent=1 // pred_fallthru
      _
    // Predicated region
    $region14: #{conv_stacked_a3tgcn.1} parent=1 // pred_check
      _
    $region15: #{conv_stacked_a3tgcn.1} parent=1 // pred_check_branch
      %19 = sbr.rel (0) target = $region17
    $region16: #{conv_stacked_a3tgcn.1} parent=1 // pred_region
      _
    $region17: #{conv_stacked_a3tgcn.1} parent=1 // pred_fallthru
      _
    // Predicated region
    $region18: #{conv_stacked_a3tgcn.1} parent=1 // pred_check
      _
    $region19: #{conv_stacked_a3tgcn.1} parent=1 // pred_check_branch
      %21 = sbr.rel (0) target = $region21
    $region20: #{conv_stacked_a3tgcn.1} parent=1 // pred_region
      %23 = vsyncadd [#allocation6], 0
      %s25 = sshll.u32 %s4, 4
      %s26 = int_to_ptr.vmem [resolvable:$true] %s25
      %28 = dma.vmem_to_smem %s26, 16, [#allocation4], [#allocation6]
    $region21: #{conv_stacked_a3tgcn.1} parent=1 // pred_fallthru
      _
    // Predicated region
    $region22: #{conv_stacked_a3tgcn.1} parent=1 // pred_check
      _
    $region23: #{conv_stacked_a3tgcn.1} parent=1 // pred_check_branch
      %30 = sbr.rel (0) target = $region25
    $region24: #{conv_stacked_a3tgcn.1} parent=1 // pred_region
      %32 = dma.done [#allocation6], 16
    $region25: #{conv_stacked_a3tgcn.1} parent=1 // pred_fallthru
      _
    %33 = sfence
    %v34 = vld [vmem:[%s1] sm:$0xff]
    %v35 = vld [vmem:[%s1 + $0x8] sm:$0xff]
    %v36 = vld [vmem:[%s1 + $0x10] sm:$0xff]
    %v37 = vld [vmem:[%s1 + $0x18] sm:$0xff]
    %v38 = vld [vmem:[%s0] sm:$0xff]
    %v39 = vld [vmem:[%s0 + $0x8] sm:$0xff]
    %vm40 = vcmask 130048
    %v42 = vsel %vm40, %v34, 0
    %v45 = vsel %vm40, %v35, 0
    %v48 = vsel %vm40, %v36, 0
    %v51 = vsel %vm40, %v37, 0
    %53 = vmatpush.msra.mxu0 0.0
    %54 = vmatpush.msra.mxu0 0.0
    %55 = vmatpush.msra.mxu0 0.0
    %56 = vmatpush.msra.mxu0 0.0
    %57 = vmatpush.msra.mxu0 0.0
    %58 = vmatpush.msra.mxu0 0.0
    %59 = vmatpush.msra.mxu0 0.0
    %60 = vmatpush.msra.mxu0 0.0
    %61 = vmatpush.msra.mxu0 0.0
    %62 = vmatpush.msra.mxu0 0.0
    %63 = vmatpush.msra.mxu0 0.0
    %64 = vmatpush.msra.mxu0 0.0
    %65 = vmatpush.msra.mxu0 0.0
    %66 = vmatpush.msra.mxu0 0.0
    %67 = vmatpush.msra.mxu0 %v39
    %68 = vmatpush.msra.mxu0 %v38
    %69 = vmatmul.f32.gmra.mxu0 %v42
    %v70 = vpop.f32.mrf.mxu0
    %v71 = vadd.f32 0.0, %v70
    %72 = vmatmul.f32.gmra.mxu0 %v45
    %v73 = vpop.f32.mrf.mxu0
    %v74 = vadd.f32 0.0, %v73
    %75 = vmatmul.f32.gmra.mxu0 %v48
    %v76 = vpop.f32.mrf.mxu0
    %v77 = vadd.f32 0.0, %v76
    %78 = vmatmul.f32.gmra.mxu0 %v51
    %v79 = vpop.f32.mrf.mxu0
    %v80 = vadd.f32 0.0, %v79
    %81 = vdwg.mxu0
    %vm82 = vcmask 31744
    %83 = vst.msk [vmem:[#allocation2] sm:$0xff] %vm82, %v71
    %84 = vst.msk [vmem:[#allocation2 + $0x8] sm:$0xff] %vm82, %v74
    %85 = vst.msk [vmem:[#allocation3] sm:$0xff] %vm82, %v77
    %86 = vst.msk [vmem:[#allocation3 + $0x8] sm:$0xff] %vm82, %v80
    %v87 = vld [vmem:[%s0 + $0x10] sm:$0xff]
    %v88 = vld [vmem:[%s0 + $0x18] sm:$0xff]
    %89 = vmatpush.msra.mxu0 0.0
    %90 = vmatpush.msra.mxu0 0.0
    %91 = vmatpush.msra.mxu0 0.0
    %92 = vmatpush.msra.mxu0 0.0
    %93 = vmatpush.msra.mxu0 0.0
    %94 = vmatpush.msra.mxu0 0.0
    %95 = vmatpush.msra.mxu0 0.0
    %96 = vmatpush.msra.mxu0 0.0
    %97 = vmatpush.msra.mxu0 0.0
    %98 = vmatpush.msra.mxu0 0.0
    %99 = vmatpush.msra.mxu0 0.0
    %100 = vmatpush.msra.mxu0 0.0
    %101 = vmatpush.msra.mxu0 0.0
    %102 = vmatpush.msra.mxu0 0.0
    %103 = vmatpush.msra.mxu0 %v88
    %104 = vmatpush.msra.mxu0 %v87
    %105 = vmatmul.f32.gmra.mxu0 %v42
    %v106 = vpop.f32.mrf.mxu0
    %v107 = vadd.f32 0.0, %v106
    %108 = vmatmul.f32.gmra.mxu0 %v45
    %v109 = vpop.f32.mrf.mxu0
    %v110 = vadd.f32 0.0, %v109
    %111 = vmatmul.f32.gmra.mxu0 %v48
    %v112 = vpop.f32.mrf.mxu0
    %v113 = vadd.f32 0.0, %v112
    %114 = vmatmul.f32.gmra.mxu0 %v51
    %v115 = vpop.f32.mrf.mxu0
    %v116 = vadd.f32 0.0, %v115
    %117 = vdwg.mxu0
    %118 = vst.msk [vmem:[#allocation2 + $0x10] sm:$0xff] %vm82, %v107
    %119 = vst.msk [vmem:[#allocation2 + $0x18] sm:$0xff] %vm82, %v110
    %120 = vst.msk [vmem:[#allocation3 + $0x10] sm:$0xff] %vm82, %v113
    %121 = vst.msk [vmem:[#allocation3 + $0x18] sm:$0xff] %vm82, %v116
    %v122 = vld [vmem:[%s0 + $0x20] sm:$0xff]
    %v123 = vld [vmem:[%s0 + $0x28] sm:$0xff]
    %124 = vmatpush.msra.mxu0 0.0
    %125 = vmatpush.msra.mxu0 0.0
    %126 = vmatpush.msra.mxu0 0.0
    %127 = vmatpush.msra.mxu0 0.0
    %128 = vmatpush.msra.mxu0 0.0
    %129 = vmatpush.msra.mxu0 0.0
    %130 = vmatpush.msra.mxu0 0.0
    %131 = vmatpush.msra.mxu0 0.0
    %132 = vmatpush.msra.mxu0 0.0
    %133 = vmatpush.msra.mxu0 0.0
    %134 = vmatpush.msra.mxu0 0.0
    %135 = vmatpush.msra.mxu0 0.0
    %136 = vmatpush.msra.mxu0 0.0
    %137 = vmatpush.msra.mxu0 0.0
    %138 = vmatpush.msra.mxu0 %v123
    %139 = vmatpush.msra.mxu0 %v122
    %140 = vmatmul.f32.gmra.mxu0 %v42
    %v141 = vpop.f32.mrf.mxu0
    %v142 = vadd.f32 0.0, %v141
    %143 = vmatmul.f32.gmra.mxu0 %v45
    %v144 = vpop.f32.mrf.mxu0
    %v145 = vadd.f32 0.0, %v144
    %146 = vmatmul.f32.gmra.mxu0 %v48
    %v147 = vpop.f32.mrf.mxu0
    %v148 = vadd.f32 0.0, %v147
    %149 = vmatmul.f32.gmra.mxu0 %v51
    %v150 = vpop.f32.mrf.mxu0
    %v151 = vadd.f32 0.0, %v150
    %152 = vdwg.mxu0
    %153 = vst.msk [vmem:[#allocation2 + $0x20] sm:$0xff] %vm82, %v142
    %154 = vst.msk [vmem:[#allocation2 + $0x28] sm:$0xff] %vm82, %v145
    %155 = vst.msk [vmem:[#allocation3 + $0x20] sm:$0xff] %vm82, %v148
    %156 = vst.msk [vmem:[#allocation3 + $0x28] sm:$0xff] %vm82, %v151
    %v157 = vld [vmem:[%s0 + $0x30] sm:$0xff]
    %v158 = vld [vmem:[%s0 + $0x38] sm:$0xff]
    %159 = vmatpush.msra.mxu0 0.0
    %160 = vmatpush.msra.mxu0 0.0
    %161 = vmatpush.msra.mxu0 0.0
    %162 = vmatpush.msra.mxu0 0.0
    %163 = vmatpush.msra.mxu0 0.0
    %164 = vmatpush.msra.mxu0 0.0
    %165 = vmatpush.msra.mxu0 0.0
    %166 = vmatpush.msra.mxu0 0.0
    %167 = vmatpush.msra.mxu0 0.0
    %168 = vmatpush.msra.mxu0 0.0
    %169 = vmatpush.msra.mxu0 0.0
    %170 = vmatpush.msra.mxu0 0.0
    %171 = vmatpush.msra.mxu0 0.0
    %172 = vmatpush.msra.mxu0 0.0
    %173 = vmatpush.msra.mxu0 %v158
    %174 = vmatpush.msra.mxu0 %v157
    %175 = vmatmul.f32.gmra.mxu0 %v42
    %v176 = vpop.f32.mrf.mxu0
    %v177 = vadd.f32 0.0, %v176
    %178 = vmatmul.f32.gmra.mxu0 %v45
    %v179 = vpop.f32.mrf.mxu0
    %v180 = vadd.f32 0.0, %v179
    %181 = vmatmul.f32.gmra.mxu0 %v48
    %v182 = vpop.f32.mrf.mxu0
    %v183 = vadd.f32 0.0, %v182
    %184 = vmatmul.f32.gmra.mxu0 %v51
    %v185 = vpop.f32.mrf.mxu0
    %v186 = vadd.f32 0.0, %v185
    %187 = vdwg.mxu0
    %188 = vst.msk [vmem:[#allocation2 + $0x30] sm:$0xff] %vm82, %v177
    %189 = vst.msk [vmem:[#allocation2 + $0x38] sm:$0xff] %vm82, %v180
    %190 = vst.msk [vmem:[#allocation3 + $0x30] sm:$0xff] %vm82, %v183
    %191 = vst.msk [vmem:[#allocation3 + $0x38] sm:$0xff] %vm82, %v186
    %v192 = vld [vmem:[%s0 + $0x40] sm:$0xff]
    %v193 = vld [vmem:[%s0 + $0x48] sm:$0xff]
    %194 = vmatpush.msra.mxu0 0.0
    %195 = vmatpush.msra.mxu0 0.0
    %196 = vmatpush.msra.mxu0 0.0
    %197 = vmatpush.msra.mxu0 0.0
    %198 = vmatpush.msra.mxu0 0.0
    %199 = vmatpush.msra.mxu0 0.0
    %200 = vmatpush.msra.mxu0 0.0
    %201 = vmatpush.msra.mxu0 0.0
    %202 = vmatpush.msra.mxu0 0.0
    %203 = vmatpush.msra.mxu0 0.0
    %204 = vmatpush.msra.mxu0 0.0
    %205 = vmatpush.msra.mxu0 0.0
    %206 = vmatpush.msra.mxu0 0.0
    %207 = vmatpush.msra.mxu0 0.0
    %208 = vmatpush.msra.mxu0 %v193
    %209 = vmatpush.msra.mxu0 %v192
    %210 = vmatmul.f32.gmra.mxu0 %v42
    %v211 = vpop.f32.mrf.mxu0
    %v212 = vadd.f32 0.0, %v211
    %213 = vmatmul.f32.gmra.mxu0 %v45
    %v214 = vpop.f32.mrf.mxu0
    %v215 = vadd.f32 0.0, %v214
    %216 = vmatmul.f32.gmra.mxu0 %v48
    %v217 = vpop.f32.mrf.mxu0
    %v218 = vadd.f32 0.0, %v217
    %219 = vmatmul.f32.gmra.mxu0 %v51
    %v220 = vpop.f32.mrf.mxu0
    %v221 = vadd.f32 0.0, %v220
    %222 = vdwg.mxu0
    %223 = vst.msk [vmem:[#allocation2 + $0x40] sm:$0xff] %vm82, %v212
    %224 = vst.msk [vmem:[#allocation2 + $0x48] sm:$0xff] %vm82, %v215
    %225 = vst.msk [vmem:[#allocation3 + $0x40] sm:$0xff] %vm82, %v218
    %226 = vst.msk [vmem:[#allocation3 + $0x48] sm:$0xff] %vm82, %v221
    %v227 = vld [vmem:[%s0 + $0x50] sm:$0xff]
    %v228 = vld [vmem:[%s0 + $0x58] sm:$0xff]
    %229 = vmatpush.msra.mxu0 0.0
    %230 = vmatpush.msra.mxu0 0.0
    %231 = vmatpush.msra.mxu0 0.0
    %232 = vmatpush.msra.mxu0 0.0
    %233 = vmatpush.msra.mxu0 0.0
    %234 = vmatpush.msra.mxu0 0.0
    %235 = vmatpush.msra.mxu0 0.0
    %236 = vmatpush.msra.mxu0 0.0
    %237 = vmatpush.msra.mxu0 0.0
    %238 = vmatpush.msra.mxu0 0.0
    %239 = vmatpush.msra.mxu0 0.0
    %240 = vmatpush.msra.mxu0 0.0
    %241 = vmatpush.msra.mxu0 0.0
    %242 = vmatpush.msra.mxu0 0.0
    %243 = vmatpush.msra.mxu0 %v228
    %244 = vmatpush.msra.mxu0 %v227
    %245 = vmatmul.f32.gmra.mxu0 %v42
    %v246 = vpop.f32.mrf.mxu0
    %v247 = vadd.f32 0.0, %v246
    %248 = vmatmul.f32.gmra.mxu0 %v45
    %v249 = vpop.f32.mrf.mxu0
    %v250 = vadd.f32 0.0, %v249
    %251 = vmatmul.f32.gmra.mxu0 %v48
    %v252 = vpop.f32.mrf.mxu0
    %v253 = vadd.f32 0.0, %v252
    %254 = vmatmul.f32.gmra.mxu0 %v51
    %v255 = vpop.f32.mrf.mxu0
    %v256 = vadd.f32 0.0, %v255
    %257 = vdwg.mxu0
    %258 = vst.msk [vmem:[#allocation2 + $0x50] sm:$0xff] %vm82, %v247
    %259 = vst.msk [vmem:[#allocation2 + $0x58] sm:$0xff] %vm82, %v250
    %260 = vst.msk [vmem:[#allocation3 + $0x50] sm:$0xff] %vm82, %v253
    %261 = vst.msk [vmem:[#allocation3 + $0x58] sm:$0xff] %vm82, %v256
    %v262 = vld [vmem:[%s0 + $0x60] sm:$0xff]
    %v263 = vld [vmem:[%s0 + $0x68] sm:$0xff]
    %264 = vmatpush.msra.mxu0 0.0
    %265 = vmatpush.msra.mxu0 0.0
    %266 = vmatpush.msra.mxu0 0.0
    %267 = vmatpush.msra.mxu0 0.0
    %268 = vmatpush.msra.mxu0 0.0
    %269 = vmatpush.msra.mxu0 0.0
    %270 = vmatpush.msra.mxu0 0.0
    %271 = vmatpush.msra.mxu0 0.0
    %272 = vmatpush.msra.mxu0 0.0
    %273 = vmatpush.msra.mxu0 0.0
    %274 = vmatpush.msra.mxu0 0.0
    %275 = vmatpush.msra.mxu0 0.0
    %276 = vmatpush.msra.mxu0 0.0
    %277 = vmatpush.msra.mxu0 0.0
    %278 = vmatpush.msra.mxu0 %v263
    %279 = vmatpush.msra.mxu0 %v262
    %280 = vmatmul.f32.gmra.mxu0 %v42
    %v281 = vpop.f32.mrf.mxu0
    %v282 = vadd.f32 0.0, %v281
    %283 = vmatmul.f32.gmra.mxu0 %v45
    %v284 = vpop.f32.mrf.mxu0
    %v285 = vadd.f32 0.0, %v284
    %286 = vmatmul.f32.gmra.mxu0 %v48
    %v287 = vpop.f32.mrf.mxu0
    %v288 = vadd.f32 0.0, %v287
    %289 = vmatmul.f32.gmra.mxu0 %v51
    %v290 = vpop.f32.mrf.mxu0
    %v291 = vadd.f32 0.0, %v290
    %292 = vdwg.mxu0
    %293 = vst.msk [vmem:[#allocation2 + $0x60] sm:$0xff] %vm82, %v282
    %294 = vst.msk [vmem:[#allocation2 + $0x68] sm:$0xff] %vm82, %v285
    %295 = vst.msk [vmem:[#allocation3 + $0x60] sm:$0xff] %vm82, %v288
    %296 = vst.msk [vmem:[#allocation3 + $0x68] sm:$0xff] %vm82, %v291
    %v297 = vld [vmem:[%s0 + $0x70] sm:$0xff]
    %v298 = vld [vmem:[%s0 + $0x78] sm:$0xff]
    %299 = vmatpush.msra.mxu0 0.0
    %300 = vmatpush.msra.mxu0 0.0
    %301 = vmatpush.msra.mxu0 0.0
    %302 = vmatpush.msra.mxu0 0.0
    %303 = vmatpush.msra.mxu0 0.0
    %304 = vmatpush.msra.mxu0 0.0
    %305 = vmatpush.msra.mxu0 0.0
    %306 = vmatpush.msra.mxu0 0.0
    %307 = vmatpush.msra.mxu0 0.0
    %308 = vmatpush.msra.mxu0 0.0
    %309 = vmatpush.msra.mxu0 0.0
    %310 = vmatpush.msra.mxu0 0.0
    %311 = vmatpush.msra.mxu0 0.0
    %312 = vmatpush.msra.mxu0 0.0
    %313 = vmatpush.msra.mxu0 %v298
    %314 = vmatpush.msra.mxu0 %v297
    %315 = vmatmul.f32.gmra.mxu0 %v42
    %v316 = vpop.f32.mrf.mxu0
    %v317 = vadd.f32 0.0, %v316
    %318 = vmatmul.f32.gmra.mxu0 %v45
    %v319 = vpop.f32.mrf.mxu0
    %v320 = vadd.f32 0.0, %v319
    %321 = vmatmul.f32.gmra.mxu0 %v48
    %v322 = vpop.f32.mrf.mxu0
    %v323 = vadd.f32 0.0, %v322
    %324 = vmatmul.f32.gmra.mxu0 %v51
    %v325 = vpop.f32.mrf.mxu0
    %v326 = vadd.f32 0.0, %v325
    %327 = vdwg.mxu0
    %328 = vst.msk [vmem:[#allocation2 + $0x70] sm:$0xff] %vm82, %v317
    %329 = vst.msk [vmem:[#allocation2 + $0x78] sm:$0xff] %vm82, %v320
    %330 = vst.msk [vmem:[#allocation3 + $0x70] sm:$0xff] %vm82, %v323
    %331 = vst.msk [vmem:[#allocation3 + $0x78] sm:$0xff] %vm82, %v326
    %v332 = vld [vmem:[#allocation2] sm:$0xff]
    %v333 = vld [vmem:[#allocation2 + $0x8] sm:$0xff]
    %v334 = vld [vmem:[#allocation2 + $0x10] sm:$0xff]
    %v335 = vld [vmem:[#allocation2 + $0x18] sm:$0xff]
    %v336 = vld [vmem:[#allocation2 + $0x20] sm:$0xff]
    %v337 = vld [vmem:[#allocation2 + $0x28] sm:$0xff]
    %v338 = vld [vmem:[#allocation2 + $0x30] sm:$0xff]
    %v339 = vld [vmem:[#allocation2 + $0x38] sm:$0xff]
    %v340 = vld [vmem:[#allocation2 + $0x40] sm:$0xff]
    %v341 = vld [vmem:[#allocation2 + $0x48] sm:$0xff]
    %v342 = vld [vmem:[#allocation2 + $0x50] sm:$0xff]
    %v343 = vld [vmem:[#allocation2 + $0x58] sm:$0xff]
    %v344 = vld [vmem:[#allocation2 + $0x60] sm:$0xff]
    %v345 = vld [vmem:[#allocation2 + $0x68] sm:$0xff]
    %v346 = vld [vmem:[#allocation2 + $0x70] sm:$0xff]
    %v347 = vld [vmem:[#allocation2 + $0x78] sm:$0xff]
    %v348 = vld [vmem:[#allocation3] sm:$0xff]
    %v349 = vld [vmem:[#allocation3 + $0x8] sm:$0xff]
    %v350 = vld [vmem:[#allocation3 + $0x10] sm:$0xff]
    %v351 = vld [vmem:[#allocation3 + $0x18] sm:$0xff]
    %v352 = vld [vmem:[#allocation3 + $0x20] sm:$0xff]
    %v353 = vld [vmem:[#allocation3 + $0x28] sm:$0xff]
    %v354 = vld [vmem:[#allocation3 + $0x30] sm:$0xff]
    %v355 = vld [vmem:[#allocation3 + $0x38] sm:$0xff]
    %v356 = vld [vmem:[#allocation3 + $0x40] sm:$0xff]
    %v357 = vld [vmem:[#allocation3 + $0x48] sm:$0xff]
    %v358 = vld [vmem:[#allocation3 + $0x50] sm:$0xff]
    %v359 = vld [vmem:[#allocation3 + $0x58] sm:$0xff]
    %v360 = vld [vmem:[#allocation3 + $0x60] sm:$0xff]
    %v361 = vld [vmem:[#allocation3 + $0x68] sm:$0xff]
    %v362 = vld [vmem:[#allocation3 + $0x70] sm:$0xff]
    %v363 = vld [vmem:[#allocation3 + $0x78] sm:$0xff]
    %v364 = vld [vmem:[%s2] sm:$0xf]
    %v365 = vld [vmem:[%s2 + $0x8] sm:$0xf]
    %v366 = vld [vmem:[%s2 + $0x10] sm:$0xff]
    %v367 = vld [vmem:[%s2 + $0x18] sm:$0xff]
    %v368 = vld [vmem:[%s2 + $0x20] sm:$0xff]
    %v369 = vld [vmem:[%s2 + $0x28] sm:$0xff]
    %v370 = vld [vmem:[%s2 + $0x30] sm:$0xff]
    %v371 = vld [vmem:[%s2 + $0x38] sm:$0xff]
    %v372 = vld [vmem:[%s2 + $0x40] sm:$0xff]
    %v373 = vld [vmem:[%s2 + $0x48] sm:$0xff]
    %v374 = vld [vmem:[%s2 + $0x50] sm:$0xff]
    %v375 = vld [vmem:[%s2 + $0x58] sm:$0xff]
    %v376 = vld [vmem:[%s2 + $0x60] sm:$0xff]
    %v377 = vld [vmem:[%s2 + $0x68] sm:$0xff]
    %v378 = vld [vmem:[%s2 + $0x70] sm:$0xff]
    %v379 = vld [vmem:[%s2 + $0x78] sm:$0xff]
    %v380 = vld [vmem:[%s2 + $0x80] sm:$0xff]
    %v381 = vld [vmem:[%s2 + $0x88] sm:$0xff]
    %v382 = vld [vmem:[%s2 + $0x90] sm:$0xff]
    %v383 = vld [vmem:[%s2 + $0x98] sm:$0xff]
    %v384 = vld [vmem:[%s2 + $0xa0] sm:$0xff]
    %v385 = vld [vmem:[%s2 + $0xa8] sm:$0xff]
    %v386 = vld [vmem:[%s2 + $0xb0] sm:$0x1]
    %v387 = vld [vmem:[%s2 + $0xb8] sm:$0x1]
    %v388 = vld [vmem:[%s2 + $0xc0] sm:$0x1]
    %v389 = vld [vmem:[%s3] sm:$0xff]
    %v390 = vld [vmem:[%s3 + $0x8] sm:$0xff]
    %v391 = vld [vmem:[%s3 + $0x10] sm:$0xff]
    %v392 = vld [vmem:[%s3 + $0x18] sm:$0xff]
    %v393 = vld [vmem:[%s3 + $0x20] sm:$0xff]
    %v394 = vld [vmem:[%s3 + $0x28] sm:$0xff]
    %v395 = vld [vmem:[%s3 + $0x30] sm:$0xff]
    %v396 = vld [vmem:[%s3 + $0x38] sm:$0xff]
    %v397 = vld [vmem:[%s3 + $0x40] sm:$0xff]
    %v398 = vld [vmem:[%s3 + $0x48] sm:$0xff]
    %v399 = vld [vmem:[%s3 + $0x50] sm:$0xff]
    %v400 = vld [vmem:[%s3 + $0x58] sm:$0xff]
    %v401 = vld [vmem:[%s3 + $0x60] sm:$0xff]
    %v402 = vld [vmem:[%s3 + $0x68] sm:$0xff]
    %v403 = vld [vmem:[%s3 + $0x70] sm:$0xff]
    %v404 = vld [vmem:[%s3 + $0x78] sm:$0xff]
    %v406 = vsel %vm82, %v348, 0
    %v409 = vsel %vm82, %v349, 0
    %v412 = vsel %vm82, %v350, 0
    %v415 = vsel %vm82, %v351, 0
    %v418 = vsel %vm82, %v352, 0
    %v421 = vsel %vm82, %v353, 0
    %v424 = vsel %vm82, %v354, 0
    %v427 = vsel %vm82, %v355, 0
    %v430 = vsel %vm82, %v356, 0
    %v433 = vsel %vm82, %v357, 0
    %v436 = vsel %vm82, %v358, 0
    %v439 = vsel %vm82, %v359, 0
    %v442 = vsel %vm82, %v360, 0
    %v445 = vsel %vm82, %v361, 0
    %v448 = vsel %vm82, %v362, 0
    %v451 = vsel %vm82, %v363, 0
    %vm453 = vcmask 1043456
    %v455 = vsel %vm453, %v365, 0
    %457 = vmatpush.msra.mxu0 0.0
    %458 = vmatpush.msra.mxu0 0.0
    %459 = vmatpush.msra.mxu0 0.0
    %460 = vmatpush.msra.mxu0 0.0
    %461 = vmatpush.msra.mxu0 0.0
    %462 = vmatpush.msra.mxu0 0.0
    %463 = vmatpush.msra.mxu0 0.0
    %464 = vmatpush.msra.mxu0 0.0
    %465 = vmatpush.msra.mxu0 0.0
    %466 = vmatpush.msra.mxu0 0.0
    %467 = vmatpush.msra.mxu0 0.0
    %468 = vmatpush.msra.mxu0 0.0
    %469 = vmatpush.msra.mxu0 0.0
    %470 = vmatpush.msra.mxu0 0.0
    %471 = vmatpush.msra.mxu0 0.0
    %472 = vmatpush.msra.mxu0 %v455
    %473 = vmatmul.f32.gmra.mxu0 %v406
    %v474 = vpop.f32.mrf.mxu0
    %v475 = vadd.f32 %v389, %v474
    %476 = vmatmul.f32.gmra.mxu0 %v409
    %v477 = vpop.f32.mrf.mxu0
    %v478 = vadd.f32 %v390, %v477
    %479 = vmatmul.f32.gmra.mxu0 %v412
    %v480 = vpop.f32.mrf.mxu0
    %v481 = vadd.f32 %v391, %v480
    %482 = vmatmul.f32.gmra.mxu0 %v415
    %v483 = vpop.f32.mrf.mxu0
    %v484 = vadd.f32 %v392, %v483
    %485 = vmatmul.f32.gmra.mxu0 %v418
    %v486 = vpop.f32.mrf.mxu0
    %v487 = vadd.f32 %v393, %v486
    %488 = vmatmul.f32.gmra.mxu0 %v421
    %v489 = vpop.f32.mrf.mxu0
    %v490 = vadd.f32 %v394, %v489
    %491 = vmatmul.f32.gmra.mxu0 %v424
    %v492 = vpop.f32.mrf.mxu0
    %v493 = vadd.f32 %v395, %v492
    %494 = vmatmul.f32.gmra.mxu0 %v427
    %v495 = vpop.f32.mrf.mxu0
    %v496 = vadd.f32 %v396, %v495
    %497 = vmatmul.f32.gmra.mxu0 %v430
    %v498 = vpop.f32.mrf.mxu0
    %v499 = vadd.f32 %v397, %v498
    %500 = vmatmul.f32.gmra.mxu0 %v433
    %v501 = vpop.f32.mrf.mxu0
    %v502 = vadd.f32 %v398, %v501
    %503 = vmatmul.f32.gmra.mxu0 %v436
    %v504 = vpop.f32.mrf.mxu0
    %v505 = vadd.f32 %v399, %v504
    %506 = vmatmul.f32.gmra.mxu0 %v439
    %v507 = vpop.f32.mrf.mxu0
    %v508 = vadd.f32 %v400, %v507
    %509 = vmatmul.f32.gmra.mxu0 %v442
    %v510 = vpop.f32.mrf.mxu0
    %v511 = vadd.f32 %v401, %v510
    %512 = vmatmul.f32.gmra.mxu0 %v445
    %v513 = vpop.f32.mrf.mxu0
    %v514 = vadd.f32 %v402, %v513
    %515 = vmatmul.f32.gmra.mxu0 %v448
    %v516 = vpop.f32.mrf.mxu0
    %v517 = vadd.f32 %v403, %v516
    %518 = vmatmul.f32.gmra.mxu0 %v451
    %v519 = vpop.f32.mrf.mxu0
    %v520 = vadd.f32 %v404, %v519
    %521 = vdwg.mxu0
    %v522 = vperm.slane %v386, 0
    %v524 = vsel %vm82, %v332, 0
    %v527 = vsel %vm82, %v333, 0
    %v530 = vsel %vm82, %v334, 0
    %v533 = vsel %vm82, %v335, 0
    %v536 = vsel %vm82, %v336, 0
    %v539 = vsel %vm82, %v337, 0
    %v542 = vsel %vm82, %v338, 0
    %v545 = vsel %vm82, %v339, 0
    %v548 = vsel %vm82, %v340, 0
    %v551 = vsel %vm82, %v341, 0
    %v554 = vsel %vm82, %v342, 0
    %v557 = vsel %vm82, %v343, 0
    %v560 = vsel %vm82, %v344, 0
    %v563 = vsel %vm82, %v345, 0
    %v566 = vsel %vm82, %v346, 0
    %v569 = vsel %vm82, %v347, 0
    %v572 = vsel %vm453, %v364, 0
    %574 = vmatpush.msra.mxu0 0.0
    %575 = vmatpush.msra.mxu0 0.0
    %576 = vmatpush.msra.mxu0 0.0
    %577 = vmatpush.msra.mxu0 0.0
    %578 = vmatpush.msra.mxu0 0.0
    %579 = vmatpush.msra.mxu0 0.0
    %580 = vmatpush.msra.mxu0 0.0
    %581 = vmatpush.msra.mxu0 0.0
    %582 = vmatpush.msra.mxu0 0.0
    %583 = vmatpush.msra.mxu0 0.0
    %584 = vmatpush.msra.mxu0 0.0
    %585 = vmatpush.msra.mxu0 0.0
    %586 = vmatpush.msra.mxu0 0.0
    %587 = vmatpush.msra.mxu0 0.0
    %588 = vmatpush.msra.mxu0 0.0
    %589 = vmatpush.msra.mxu0 %v572
    %590 = vmatmul.f32.gmra.mxu0 %v524
    %v591 = vpop.f32.mrf.mxu0
    %v592 = vadd.f32 %v522, %v591
    %593 = vmatmul.f32.gmra.mxu0 %v527
    %v594 = vpop.f32.mrf.mxu0
    %v595 = vadd.f32 %v522, %v594
    %596 = vmatmul.f32.gmra.mxu0 %v530
    %v597 = vpop.f32.mrf.mxu0
    %v598 = vadd.f32 %v522, %v597
    %599 = vmatmul.f32.gmra.mxu0 %v533
    %v600 = vpop.f32.mrf.mxu0
    %v601 = vadd.f32 %v522, %v600
    %602 = vmatmul.f32.gmra.mxu0 %v536
    %v603 = vpop.f32.mrf.mxu0
    %v604 = vadd.f32 %v522, %v603
    %605 = vmatmul.f32.gmra.mxu0 %v539
    %v606 = vpop.f32.mrf.mxu0
    %v607 = vadd.f32 %v522, %v606
    %608 = vmatmul.f32.gmra.mxu0 %v542
    %v609 = vpop.f32.mrf.mxu0
    %v610 = vadd.f32 %v522, %v609
    %611 = vmatmul.f32.gmra.mxu0 %v545
    %v612 = vpop.f32.mrf.mxu0
    %v613 = vadd.f32 %v522, %v612
    %614 = vmatmul.f32.gmra.mxu0 %v548
    %v615 = vpop.f32.mrf.mxu0
    %v616 = vadd.f32 %v522, %v615
    %617 = vmatmul.f32.gmra.mxu0 %v551
    %v618 = vpop.f32.mrf.mxu0
    %v619 = vadd.f32 %v522, %v618
    %620 = vmatmul.f32.gmra.mxu0 %v554
    %v621 = vpop.f32.mrf.mxu0
    %v622 = vadd.f32 %v522, %v621
    %623 = vmatmul.f32.gmra.mxu0 %v557
    %v624 = vpop.f32.mrf.mxu0
    %v625 = vadd.f32 %v522, %v624
    %626 = vmatmul.f32.gmra.mxu0 %v560
    %v627 = vpop.f32.mrf.mxu0
    %v628 = vadd.f32 %v522, %v627
    %629 = vmatmul.f32.gmra.mxu0 %v563
    %v630 = vpop.f32.mrf.mxu0
    %v631 = vadd.f32 %v522, %v630
    %632 = vmatmul.f32.gmra.mxu0 %v566
    %v633 = vpop.f32.mrf.mxu0
    %v634 = vadd.f32 %v522, %v633
    %635 = vmatmul.f32.gmra.mxu0 %v569
    %v636 = vpop.f32.mrf.mxu0
    %v637 = vadd.f32 %v522, %v636
    %638 = vdwg.mxu0
    %vm639 = vcmask 785408
    %v641 = vsel %vm639, %v592, 0
    %v644 = vsel %vm639, %v595, 0
    %v647 = vsel %vm639, %v598, 0
    %v650 = vsel %vm639, %v601, 0
    %v653 = vsel %vm639, %v604, 0
    %v656 = vsel %vm639, %v607, 0
    %v659 = vsel %vm639, %v610, 0
    %v662 = vsel %vm639, %v613, 0
    %v665 = vsel %vm639, %v616, 0
    %v668 = vsel %vm639, %v619, 0
    %v671 = vsel %vm639, %v622, 0
    %v674 = vsel %vm639, %v625, 0
    %v677 = vsel %vm639, %v628, 0
    %v680 = vsel %vm639, %v631, 0
    %v683 = vsel %vm639, %v634, 0
    %v686 = vsel %vm639, %v637, 0
    %688 = vmatpush.msra.mxu0 0.0
    %689 = vmatpush.msra.mxu0 0.0
    %690 = vmatpush.msra.mxu0 0.0
    %691 = vmatpush.msra.mxu0 0.0
    %692 = vmatpush.msra.mxu0 %v377
    %693 = vmatpush.msra.mxu0 %v376
    %694 = vmatpush.msra.mxu0 %v375
    %695 = vmatpush.msra.mxu0 %v374
    %696 = vmatpush.msra.mxu0 %v373
    %697 = vmatpush.msra.mxu0 %v372
    %698 = vmatpush.msra.mxu0 %v371
    %699 = vmatpush.msra.mxu0 %v370
    %700 = vmatpush.msra.mxu0 %v369
    %701 = vmatpush.msra.mxu0 %v368
    %702 = vmatpush.msra.mxu0 %v367
    %703 = vmatpush.msra.mxu0 %v366
    %704 = vmatmul.f32.gmra.mxu0 %v641
    %v705 = vpop.f32.mrf.mxu0
    %v706 = vadd.f32 0.0, %v705
    %707 = vmatmul.f32.gmra.mxu0 %v644
    %v708 = vpop.f32.mrf.mxu0
    %v709 = vadd.f32 0.0, %v708
    %710 = vmatmul.f32.gmra.mxu0 %v647
    %v711 = vpop.f32.mrf.mxu0
    %v712 = vadd.f32 0.0, %v711
    %713 = vmatmul.f32.gmra.mxu0 %v650
    %v714 = vpop.f32.mrf.mxu0
    %v715 = vadd.f32 0.0, %v714
    %716 = vmatmul.f32.gmra.mxu0 %v653
    %v717 = vpop.f32.mrf.mxu0
    %v718 = vadd.f32 0.0, %v717
    %719 = vmatmul.f32.gmra.mxu0 %v656
    %v720 = vpop.f32.mrf.mxu0
    %v721 = vadd.f32 0.0, %v720
    %722 = vmatmul.f32.gmra.mxu0 %v659
    %v723 = vpop.f32.mrf.mxu0
    %v724 = vadd.f32 0.0, %v723
    %725 = vmatmul.f32.gmra.mxu0 %v662
    %v726 = vpop.f32.mrf.mxu0
    %v727 = vadd.f32 0.0, %v726
    %728 = vmatmul.f32.gmra.mxu0 %v665
    %v729 = vpop.f32.mrf.mxu0
    %v730 = vadd.f32 0.0, %v729
    %731 = vmatmul.f32.gmra.mxu0 %v668
    %v732 = vpop.f32.mrf.mxu0
    %v733 = vadd.f32 0.0, %v732
    %734 = vmatmul.f32.gmra.mxu0 %v671
    %v735 = vpop.f32.mrf.mxu0
    %v736 = vadd.f32 0.0, %v735
    %737 = vmatmul.f32.gmra.mxu0 %v674
    %v738 = vpop.f32.mrf.mxu0
    %v739 = vadd.f32 0.0, %v738
    %740 = vmatmul.f32.gmra.mxu0 %v677
    %v741 = vpop.f32.mrf.mxu0
    %v742 = vadd.f32 0.0, %v741
    %743 = vmatmul.f32.gmra.mxu0 %v680
    %v744 = vpop.f32.mrf.mxu0
    %v745 = vadd.f32 0.0, %v744
    %746 = vmatmul.f32.gmra.mxu0 %v683
    %v747 = vpop.f32.mrf.mxu0
    %v748 = vadd.f32 0.0, %v747
    %749 = vmatmul.f32.gmra.mxu0 %v686
    %v750 = vpop.f32.mrf.mxu0
    %v751 = vadd.f32 0.0, %v750
    %752 = vdwg.mxu0
    %vm753 = vcmask 261120
    %v755 = vsel %vm753, %v475, 0
    %v758 = vsel %vm753, %v478, 0
    %v761 = vsel %vm753, %v481, 0
    %v764 = vsel %vm753, %v484, 0
    %v767 = vsel %vm753, %v487, 0
    %v770 = vsel %vm753, %v490, 0
    %v773 = vsel %vm753, %v493, 0
    %v776 = vsel %vm753, %v496, 0
    %v779 = vsel %vm753, %v499, 0
    %v782 = vsel %vm753, %v502, 0
    %v785 = vsel %vm753, %v505, 0
    %v788 = vsel %vm753, %v508, 0
    %v791 = vsel %vm753, %v511, 0
    %v794 = vsel %vm753, %v514, 0
    %v797 = vsel %vm753, %v517, 0
    %v800 = vsel %vm753, %v520, 0
    %802 = vmatpush.msra.mxu0 0.0
    %803 = vmatpush.msra.mxu0 0.0
    %804 = vmatpush.msra.mxu0 0.0
    %805 = vmatpush.msra.mxu0 0.0
    %806 = vmatpush.msra.mxu0 0.0
    %807 = vmatpush.msra.mxu0 0.0
    %808 = vmatpush.msra.mxu0 0.0
    %809 = vmatpush.msra.mxu0 0.0
    %810 = vmatpush.msra.mxu0 0.0
    %811 = vmatpush.msra.mxu0 0.0
    %812 = vmatpush.msra.mxu0 0.0
    %813 = vmatpush.msra.mxu0 0.0
    %814 = vmatpush.msra.mxu0 %v381
    %815 = vmatpush.msra.mxu0 %v380
    %816 = vmatpush.msra.mxu0 %v379
    %817 = vmatpush.msra.mxu0 %v378
    %818 = vmatmul.f32.gmra.mxu0 %v755
    %v819 = vpop.f32.mrf.mxu0
    %v820 = vadd.f32 0.0, %v819
    %821 = vmatmul.f32.gmra.mxu0 %v758
    %v822 = vpop.f32.mrf.mxu0
    %v823 = vadd.f32 0.0, %v822
    %824 = vmatmul.f32.gmra.mxu0 %v761
    %v825 = vpop.f32.mrf.mxu0
    %v826 = vadd.f32 0.0, %v825
    %827 = vmatmul.f32.gmra.mxu0 %v764
    %v828 = vpop.f32.mrf.mxu0
    %v829 = vadd.f32 0.0, %v828
    %830 = vmatmul.f32.gmra.mxu0 %v767
    %v831 = vpop.f32.mrf.mxu0
    %v832 = vadd.f32 0.0, %v831
    %833 = vmatmul.f32.gmra.mxu0 %v770
    %v834 = vpop.f32.mrf.mxu0
    %v835 = vadd.f32 0.0, %v834
    %836 = vmatmul.f32.gmra.mxu0 %v773
    %v837 = vpop.f32.mrf.mxu0
    %v838 = vadd.f32 0.0, %v837
    %839 = vmatmul.f32.gmra.mxu0 %v776
    %v840 = vpop.f32.mrf.mxu0
    %v841 = vadd.f32 0.0, %v840
    %842 = vmatmul.f32.gmra.mxu0 %v779
    %v843 = vpop.f32.mrf.mxu0
    %v844 = vadd.f32 0.0, %v843
    %845 = vmatmul.f32.gmra.mxu0 %v782
    %v846 = vpop.f32.mrf.mxu0
    %v847 = vadd.f32 0.0, %v846
    %848 = vmatmul.f32.gmra.mxu0 %v785
    %v849 = vpop.f32.mrf.mxu0
    %v850 = vadd.f32 0.0, %v849
    %851 = vmatmul.f32.gmra.mxu0 %v788
    %v852 = vpop.f32.mrf.mxu0
    %v853 = vadd.f32 0.0, %v852
    %854 = vmatmul.f32.gmra.mxu0 %v791
    %v855 = vpop.f32.mrf.mxu0
    %v856 = vadd.f32 0.0, %v855
    %857 = vmatmul.f32.gmra.mxu0 %v794
    %v858 = vpop.f32.mrf.mxu0
    %v859 = vadd.f32 0.0, %v858
    %860 = vmatmul.f32.gmra.mxu0 %v797
    %v861 = vpop.f32.mrf.mxu0
    %v862 = vadd.f32 0.0, %v861
    %863 = vmatmul.f32.gmra.mxu0 %v800
    %v864 = vpop.f32.mrf.mxu0
    %v865 = vadd.f32 0.0, %v864
    %866 = vdwg.mxu0
    %v867 = vadd.f32 %v706, %v820
    %v868 = vadd.f32 %v709, %v823
    %v869 = vadd.f32 %v712, %v826
    %v870 = vadd.f32 %v715, %v829
    %v871 = vadd.f32 %v718, %v832
    %v872 = vadd.f32 %v721, %v835
    %v873 = vadd.f32 %v724, %v838
    %v874 = vadd.f32 %v727, %v841
    %v875 = vadd.f32 %v730, %v844
    %v876 = vadd.f32 %v733, %v847
    %v877 = vadd.f32 %v736, %v850
    %v878 = vadd.f32 %v739, %v853
    %v879 = vadd.f32 %v742, %v856
    %v880 = vadd.f32 %v745, %v859
    %v881 = vadd.f32 %v748, %v862
    %v882 = vadd.f32 %v751, %v865
    %v883 = vperm.slane %v387, 0
    %v884 = vadd.f32 %v867, %v883
    %v885 = vadd.f32 %v868, %v883
    %v886 = vadd.f32 %v869, %v883
    %v887 = vadd.f32 %v870, %v883
    %v888 = vadd.f32 %v871, %v883
    %v889 = vadd.f32 %v872, %v883
    %v890 = vadd.f32 %v873, %v883
    %v891 = vadd.f32 %v874, %v883
    %v892 = vadd.f32 %v875, %v883
    %v893 = vadd.f32 %v876, %v883
    %v894 = vadd.f32 %v877, %v883
    %v895 = vadd.f32 %v878, %v883
    %v896 = vadd.f32 %v879, %v883
    %v897 = vadd.f32 %v880, %v883
    %v898 = vadd.f32 %v881, %v883
    %v899 = vadd.f32 %v882, %v883
    %v900 = vxor.u32 %v884, 2147483648
    %v901 = vxor.u32 %v885, 2147483648
    %v902 = vxor.u32 %v886, 2147483648
    %v903 = vxor.u32 %v887, 2147483648
    %v904 = vxor.u32 %v888, 2147483648
    %v905 = vxor.u32 %v889, 2147483648
    %v906 = vxor.u32 %v890, 2147483648
    %v907 = vxor.u32 %v891, 2147483648
    %v908 = vxor.u32 %v892, 2147483648
    %v909 = vxor.u32 %v893, 2147483648
    %v910 = vxor.u32 %v894, 2147483648
    %v911 = vxor.u32 %v895, 2147483648
    %v912 = vxor.u32 %v896, 2147483648
    %v913 = vxor.u32 %v897, 2147483648
    %v914 = vxor.u32 %v898, 2147483648
    %v915 = vxor.u32 %v899, 2147483648
    %v916 = vmul.f32 %v900, 1.442695
    %v917 = vpow.pop %v916
    %v918 = vmul.f32 %v901, 1.442695
    %v919 = vpow.pop %v918
    %v920 = vmul.f32 %v902, 1.442695
    %v921 = vpow.pop %v920
    %v922 = vmul.f32 %v903, 1.442695
    %v923 = vpow.pop %v922
    %v924 = vmul.f32 %v904, 1.442695
    %v925 = vpow.pop %v924
    %v926 = vmul.f32 %v905, 1.442695
    %v927 = vpow.pop %v926
    %v928 = vmul.f32 %v906, 1.442695
    %v929 = vpow.pop %v928
    %v930 = vmul.f32 %v907, 1.442695
    %v931 = vpow.pop %v930
    %v932 = vmul.f32 %v908, 1.442695
    %v933 = vpow.pop %v932
    %v934 = vmul.f32 %v909, 1.442695
    %v935 = vpow.pop %v934
    %v936 = vmul.f32 %v910, 1.442695
    %v937 = vpow.pop %v936
    %v938 = vmul.f32 %v911, 1.442695
    %v939 = vpow.pop %v938
    %v940 = vmul.f32 %v912, 1.442695
    %v941 = vpow.pop %v940
    %v942 = vmul.f32 %v913, 1.442695
    %v943 = vpow.pop %v942
    %v944 = vmul.f32 %v914, 1.442695
    %v945 = vpow.pop %v944
    %v946 = vmul.f32 %v915, 1.442695
    %v947 = vpow.pop %v946
    %v948 = vadd.f32 %v917, 1.0
    %v949 = vadd.f32 %v919, 1.0
    %v950 = vadd.f32 %v921, 1.0
    %v951 = vadd.f32 %v923, 1.0
    %v952 = vadd.f32 %v925, 1.0
    %v953 = vadd.f32 %v927, 1.0
    %v954 = vadd.f32 %v929, 1.0
    %v955 = vadd.f32 %v931, 1.0
    %v956 = vadd.f32 %v933, 1.0
    %v957 = vadd.f32 %v935, 1.0
    %v958 = vadd.f32 %v937, 1.0
    %v959 = vadd.f32 %v939, 1.0
    %v960 = vadd.f32 %v941, 1.0
    %v961 = vadd.f32 %v943, 1.0
    %v962 = vadd.f32 %v945, 1.0
    %v963 = vadd.f32 %v947, 1.0
    %v964 = vrcp.pop %v948
    %v965 = vmul.f32 %v948, %v964
    %v966 = vsub.f32 1.0, %v965
    %v967 = vmul.f32 %v964, %v966
    %v968 = vadd.f32 %v964, %v967
    %vm969 = vweird.f32 %v948
    %vm970 = vweird.f32 %v964
    %vm971 = vmor %vm969, %vm970
    %v972 = vsel %vm971, %v964, %v968
    %v973 = vand.u32 2147483647, %v948
    %vm974 = vcmp.eq.f32.partialorder %v973, 8.507059e+37
    %v975 = vand.u32 %v948, 2147483648
    %v976 = vor.u32 1.1754944e-38, %v975
    %v977 = vsel %vm974, %v976, %v972
    %v978 = vmul.f32 1.0, %v977
    %v979 = vrcp.pop %v949
    %v980 = vmul.f32 %v949, %v979
    %v981 = vsub.f32 1.0, %v980
    %v982 = vmul.f32 %v979, %v981
    %v983 = vadd.f32 %v979, %v982
    %vm984 = vweird.f32 %v949
    %vm985 = vweird.f32 %v979
    %vm986 = vmor %vm984, %vm985
    %v987 = vsel %vm986, %v979, %v983
    %v988 = vand.u32 2147483647, %v949
    %vm989 = vcmp.eq.f32.partialorder %v988, 8.507059e+37
    %v990 = vand.u32 %v949, 2147483648
    %v991 = vor.u32 1.1754944e-38, %v990
    %v992 = vsel %vm989, %v991, %v987
    %v993 = vmul.f32 1.0, %v992
    %v994 = vrcp.pop %v950
    %v995 = vmul.f32 %v950, %v994
    %v996 = vsub.f32 1.0, %v995
    %v997 = vmul.f32 %v994, %v996
    %v998 = vadd.f32 %v994, %v997
    %vm999 = vweird.f32 %v950
    %vm1000 = vweird.f32 %v994
    %vm1001 = vmor %vm999, %vm1000
    %v1002 = vsel %vm1001, %v994, %v998
    %v1003 = vand.u32 2147483647, %v950
    %vm1004 = vcmp.eq.f32.partialorder %v1003, 8.507059e+37
    %v1005 = vand.u32 %v950, 2147483648
    %v1006 = vor.u32 1.1754944e-38, %v1005
    %v1007 = vsel %vm1004, %v1006, %v1002
    %v1008 = vmul.f32 1.0, %v1007
    %v1009 = vrcp.pop %v951
    %v1010 = vmul.f32 %v951, %v1009
    %v1011 = vsub.f32 1.0, %v1010
    %v1012 = vmul.f32 %v1009, %v1011
    %v1013 = vadd.f32 %v1009, %v1012
    %vm1014 = vweird.f32 %v951
    %vm1015 = vweird.f32 %v1009
    %vm1016 = vmor %vm1014, %vm1015
    %v1017 = vsel %vm1016, %v1009, %v1013
    %v1018 = vand.u32 2147483647, %v951
    %vm1019 = vcmp.eq.f32.partialorder %v1018, 8.507059e+37
    %v1020 = vand.u32 %v951, 2147483648
    %v1021 = vor.u32 1.1754944e-38, %v1020
    %v1022 = vsel %vm1019, %v1021, %v1017
    %v1023 = vmul.f32 1.0, %v1022
    %v1024 = vrcp.pop %v952
    %v1025 = vmul.f32 %v952, %v1024
    %v1026 = vsub.f32 1.0, %v1025
    %v1027 = vmul.f32 %v1024, %v1026
    %v1028 = vadd.f32 %v1024, %v1027
    %vm1029 = vweird.f32 %v952
    %vm1030 = vweird.f32 %v1024
    %vm1031 = vmor %vm1029, %vm1030
    %v1032 = vsel %vm1031, %v1024, %v1028
    %v1033 = vand.u32 2147483647, %v952
    %vm1034 = vcmp.eq.f32.partialorder %v1033, 8.507059e+37
    %v1035 = vand.u32 %v952, 2147483648
    %v1036 = vor.u32 1.1754944e-38, %v1035
    %v1037 = vsel %vm1034, %v1036, %v1032
    %v1038 = vmul.f32 1.0, %v1037
    %v1039 = vrcp.pop %v953
    %v1040 = vmul.f32 %v953, %v1039
    %v1041 = vsub.f32 1.0, %v1040
    %v1042 = vmul.f32 %v1039, %v1041
    %v1043 = vadd.f32 %v1039, %v1042
    %vm1044 = vweird.f32 %v953
    %vm1045 = vweird.f32 %v1039
    %vm1046 = vmor %vm1044, %vm1045
    %v1047 = vsel %vm1046, %v1039, %v1043
    %v1048 = vand.u32 2147483647, %v953
    %vm1049 = vcmp.eq.f32.partialorder %v1048, 8.507059e+37
    %v1050 = vand.u32 %v953, 2147483648
    %v1051 = vor.u32 1.1754944e-38, %v1050
    %v1052 = vsel %vm1049, %v1051, %v1047
    %v1053 = vmul.f32 1.0, %v1052
    %v1054 = vrcp.pop %v954
    %v1055 = vmul.f32 %v954, %v1054
    %v1056 = vsub.f32 1.0, %v1055
    %v1057 = vmul.f32 %v1054, %v1056
    %v1058 = vadd.f32 %v1054, %v1057
    %vm1059 = vweird.f32 %v954
    %vm1060 = vweird.f32 %v1054
    %vm1061 = vmor %vm1059, %vm1060
    %v1062 = vsel %vm1061, %v1054, %v1058
    %v1063 = vand.u32 2147483647, %v954
    %vm1064 = vcmp.eq.f32.partialorder %v1063, 8.507059e+37
    %v1065 = vand.u32 %v954, 2147483648
    %v1066 = vor.u32 1.1754944e-38, %v1065
    %v1067 = vsel %vm1064, %v1066, %v1062
    %v1068 = vmul.f32 1.0, %v1067
    %v1069 = vrcp.pop %v955
    %v1070 = vmul.f32 %v955, %v1069
    %v1071 = vsub.f32 1.0, %v1070
    %v1072 = vmul.f32 %v1069, %v1071
    %v1073 = vadd.f32 %v1069, %v1072
    %vm1074 = vweird.f32 %v955
    %vm1075 = vweird.f32 %v1069
    %vm1076 = vmor %vm1074, %vm1075
    %v1077 = vsel %vm1076, %v1069, %v1073
    %v1078 = vand.u32 2147483647, %v955
    %vm1079 = vcmp.eq.f32.partialorder %v1078, 8.507059e+37
    %v1080 = vand.u32 %v955, 2147483648
    %v1081 = vor.u32 1.1754944e-38, %v1080
    %v1082 = vsel %vm1079, %v1081, %v1077
    %v1083 = vmul.f32 1.0, %v1082
    %v1084 = vrcp.pop %v956
    %v1085 = vmul.f32 %v956, %v1084
    %v1086 = vsub.f32 1.0, %v1085
    %v1087 = vmul.f32 %v1084, %v1086
    %v1088 = vadd.f32 %v1084, %v1087
    %vm1089 = vweird.f32 %v956
    %vm1090 = vweird.f32 %v1084
    %vm1091 = vmor %vm1089, %vm1090
    %v1092 = vsel %vm1091, %v1084, %v1088
    %v1093 = vand.u32 2147483647, %v956
    %vm1094 = vcmp.eq.f32.partialorder %v1093, 8.507059e+37
    %v1095 = vand.u32 %v956, 2147483648
    %v1096 = vor.u32 1.1754944e-38, %v1095
    %v1097 = vsel %vm1094, %v1096, %v1092
    %v1098 = vmul.f32 1.0, %v1097
    %v1099 = vrcp.pop %v957
    %v1100 = vmul.f32 %v957, %v1099
    %v1101 = vsub.f32 1.0, %v1100
    %v1102 = vmul.f32 %v1099, %v1101
    %v1103 = vadd.f32 %v1099, %v1102
    %vm1104 = vweird.f32 %v957
    %vm1105 = vweird.f32 %v1099
    %vm1106 = vmor %vm1104, %vm1105
    %v1107 = vsel %vm1106, %v1099, %v1103
    %v1108 = vand.u32 2147483647, %v957
    %vm1109 = vcmp.eq.f32.partialorder %v1108, 8.507059e+37
    %v1110 = vand.u32 %v957, 2147483648
    %v1111 = vor.u32 1.1754944e-38, %v1110
    %v1112 = vsel %vm1109, %v1111, %v1107
    %v1113 = vmul.f32 1.0, %v1112
    %v1114 = vrcp.pop %v958
    %v1115 = vmul.f32 %v958, %v1114
    %v1116 = vsub.f32 1.0, %v1115
    %v1117 = vmul.f32 %v1114, %v1116
    %v1118 = vadd.f32 %v1114, %v1117
    %vm1119 = vweird.f32 %v958
    %vm1120 = vweird.f32 %v1114
    %vm1121 = vmor %vm1119, %vm1120
    %v1122 = vsel %vm1121, %v1114, %v1118
    %v1123 = vand.u32 2147483647, %v958
    %vm1124 = vcmp.eq.f32.partialorder %v1123, 8.507059e+37
    %v1125 = vand.u32 %v958, 2147483648
    %v1126 = vor.u32 1.1754944e-38, %v1125
    %v1127 = vsel %vm1124, %v1126, %v1122
    %v1128 = vmul.f32 1.0, %v1127
    %v1129 = vrcp.pop %v959
    %v1130 = vmul.f32 %v959, %v1129
    %v1131 = vsub.f32 1.0, %v1130
    %v1132 = vmul.f32 %v1129, %v1131
    %v1133 = vadd.f32 %v1129, %v1132
    %vm1134 = vweird.f32 %v959
    %vm1135 = vweird.f32 %v1129
    %vm1136 = vmor %vm1134, %vm1135
    %v1137 = vsel %vm1136, %v1129, %v1133
    %v1138 = vand.u32 2147483647, %v959
    %vm1139 = vcmp.eq.f32.partialorder %v1138, 8.507059e+37
    %v1140 = vand.u32 %v959, 2147483648
    %v1141 = vor.u32 1.1754944e-38, %v1140
    %v1142 = vsel %vm1139, %v1141, %v1137
    %v1143 = vmul.f32 1.0, %v1142
    %v1144 = vrcp.pop %v960
    %v1145 = vmul.f32 %v960, %v1144
    %v1146 = vsub.f32 1.0, %v1145
    %v1147 = vmul.f32 %v1144, %v1146
    %v1148 = vadd.f32 %v1144, %v1147
    %vm1149 = vweird.f32 %v960
    %vm1150 = vweird.f32 %v1144
    %vm1151 = vmor %vm1149, %vm1150
    %v1152 = vsel %vm1151, %v1144, %v1148
    %v1153 = vand.u32 2147483647, %v960
    %vm1154 = vcmp.eq.f32.partialorder %v1153, 8.507059e+37
    %v1155 = vand.u32 %v960, 2147483648
    %v1156 = vor.u32 1.1754944e-38, %v1155
    %v1157 = vsel %vm1154, %v1156, %v1152
    %v1158 = vmul.f32 1.0, %v1157
    %v1159 = vrcp.pop %v961
    %v1160 = vmul.f32 %v961, %v1159
    %v1161 = vsub.f32 1.0, %v1160
    %v1162 = vmul.f32 %v1159, %v1161
    %v1163 = vadd.f32 %v1159, %v1162
    %vm1164 = vweird.f32 %v961
    %vm1165 = vweird.f32 %v1159
    %vm1166 = vmor %vm1164, %vm1165
    %v1167 = vsel %vm1166, %v1159, %v1163
    %v1168 = vand.u32 2147483647, %v961
    %vm1169 = vcmp.eq.f32.partialorder %v1168, 8.507059e+37
    %v1170 = vand.u32 %v961, 2147483648
    %v1171 = vor.u32 1.1754944e-38, %v1170
    %v1172 = vsel %vm1169, %v1171, %v1167
    %v1173 = vmul.f32 1.0, %v1172
    %v1174 = vrcp.pop %v962
    %v1175 = vmul.f32 %v962, %v1174
    %v1176 = vsub.f32 1.0, %v1175
    %v1177 = vmul.f32 %v1174, %v1176
    %v1178 = vadd.f32 %v1174, %v1177
    %vm1179 = vweird.f32 %v962
    %vm1180 = vweird.f32 %v1174
    %vm1181 = vmor %vm1179, %vm1180
    %v1182 = vsel %vm1181, %v1174, %v1178
    %v1183 = vand.u32 2147483647, %v962
    %vm1184 = vcmp.eq.f32.partialorder %v1183, 8.507059e+37
    %v1185 = vand.u32 %v962, 2147483648
    %v1186 = vor.u32 1.1754944e-38, %v1185
    %v1187 = vsel %vm1184, %v1186, %v1182
    %v1188 = vmul.f32 1.0, %v1187
    %v1189 = vrcp.pop %v963
    %v1190 = vmul.f32 %v963, %v1189
    %v1191 = vsub.f32 1.0, %v1190
    %v1192 = vmul.f32 %v1189, %v1191
    %v1193 = vadd.f32 %v1189, %v1192
    %vm1194 = vweird.f32 %v963
    %vm1195 = vweird.f32 %v1189
    %vm1196 = vmor %vm1194, %vm1195
    %v1197 = vsel %vm1196, %v1189, %v1193
    %v1198 = vand.u32 2147483647, %v963
    %vm1199 = vcmp.eq.f32.partialorder %v1198, 8.507059e+37
    %v1200 = vand.u32 %v963, 2147483648
    %v1201 = vor.u32 1.1754944e-38, %v1200
    %v1202 = vsel %vm1199, %v1201, %v1197
    %v1203 = vmul.f32 1.0, %v1202
    %1220 = vrot.lane.b32.xlu0 %v978, 96
    %v1221 = vpop.permute.xlu0 %1220
    %1222 = vrot.lane.b32.xlu0 %v993, 96
    %v1223 = vpop.permute.xlu0 %1222
    %1224 = vrot.lane.b32.xlu0 %v1008, 96
    %v1225 = vpop.permute.xlu0 %1224
    %1226 = vrot.lane.b32.xlu0 %v1023, 96
    %v1227 = vpop.permute.xlu0 %1226
    %1228 = vrot.lane.b32.xlu0 %v1038, 96
    %v1229 = vpop.permute.xlu0 %1228
    %1230 = vrot.lane.b32.xlu0 %v1053, 96
    %v1231 = vpop.permute.xlu0 %1230
    %1232 = vrot.lane.b32.xlu0 %v1068, 96
    %v1233 = vpop.permute.xlu0 %1232
    %1234 = vrot.lane.b32.xlu0 %v1083, 96
    %v1235 = vpop.permute.xlu0 %1234
    %1236 = vrot.lane.b32.xlu0 %v1098, 96
    %v1237 = vpop.permute.xlu0 %1236
    %1238 = vrot.lane.b32.xlu0 %v1113, 96
    %v1239 = vpop.permute.xlu0 %1238
    %1240 = vrot.lane.b32.xlu0 %v1128, 96
    %v1241 = vpop.permute.xlu0 %1240
    %1242 = vrot.lane.b32.xlu0 %v1143, 96
    %v1243 = vpop.permute.xlu0 %1242
    %1244 = vrot.lane.b32.xlu0 %v1158, 96
    %v1245 = vpop.permute.xlu0 %1244
    %1246 = vrot.lane.b32.xlu0 %v1173, 96
    %v1247 = vpop.permute.xlu0 %1246
    %1248 = vrot.lane.b32.xlu0 %v1188, 96
    %v1249 = vpop.permute.xlu0 %1248
    %1250 = vrot.lane.b32.xlu0 %v1203, 96
    %v1251 = vpop.permute.xlu0 %1250
    %v1268 = vmul.f32 %v475, %v1221
    %v1269 = vmul.f32 %v478, %v1223
    %v1270 = vmul.f32 %v481, %v1225
    %v1271 = vmul.f32 %v484, %v1227
    %v1272 = vmul.f32 %v487, %v1229
    %v1273 = vmul.f32 %v490, %v1231
    %v1274 = vmul.f32 %v493, %v1233
    %v1275 = vmul.f32 %v496, %v1235
    %v1276 = vmul.f32 %v499, %v1237
    %v1277 = vmul.f32 %v502, %v1239
    %v1278 = vmul.f32 %v505, %v1241
    %v1279 = vmul.f32 %v508, %v1243
    %v1280 = vmul.f32 %v511, %v1245
    %v1281 = vmul.f32 %v514, %v1247
    %v1282 = vmul.f32 %v517, %v1249
    %v1283 = vmul.f32 %v520, %v1251
    %v1285 = vsel %vm753, %v1268, 0
    %v1288 = vsel %vm753, %v1269, 0
    %v1291 = vsel %vm753, %v1270, 0
    %v1294 = vsel %vm753, %v1271, 0
    %v1297 = vsel %vm753, %v1272, 0
    %v1300 = vsel %vm753, %v1273, 0
    %v1303 = vsel %vm753, %v1274, 0
    %v1306 = vsel %vm753, %v1275, 0
    %v1309 = vsel %vm753, %v1276, 0
    %v1312 = vsel %vm753, %v1277, 0
    %v1315 = vsel %vm753, %v1278, 0
    %v1318 = vsel %vm753, %v1279, 0
    %v1321 = vsel %vm753, %v1280, 0
    %v1324 = vsel %vm753, %v1281, 0
    %v1327 = vsel %vm753, %v1282, 0
    %v1330 = vsel %vm753, %v1283, 0
    %1332 = vmatpush.msra.mxu0 0.0
    %1333 = vmatpush.msra.mxu0 0.0
    %1334 = vmatpush.msra.mxu0 0.0
    %1335 = vmatpush.msra.mxu0 0.0
    %1336 = vmatpush.msra.mxu0 0.0
    %1337 = vmatpush.msra.mxu0 0.0
    %1338 = vmatpush.msra.mxu0 0.0
    %1339 = vmatpush.msra.mxu0 0.0
    %1340 = vmatpush.msra.mxu0 0.0
    %1341 = vmatpush.msra.mxu0 0.0
    %1342 = vmatpush.msra.mxu0 0.0
    %1343 = vmatpush.msra.mxu0 0.0
    %1344 = vmatpush.msra.mxu0 %v385
    %1345 = vmatpush.msra.mxu0 %v384
    %1346 = vmatpush.msra.mxu0 %v383
    %1347 = vmatpush.msra.mxu0 %v382
    %1348 = vmatmul.f32.gmra.mxu0 %v1285
    %v1349 = vpop.f32.mrf.mxu0
    %v1350 = vadd.f32 0.0, %v1349
    %1351 = vmatmul.f32.gmra.mxu0 %v1288
    %v1352 = vpop.f32.mrf.mxu0
    %v1353 = vadd.f32 0.0, %v1352
    %1354 = vmatmul.f32.gmra.mxu0 %v1291
    %v1355 = vpop.f32.mrf.mxu0
    %v1356 = vadd.f32 0.0, %v1355
    %1357 = vmatmul.f32.gmra.mxu0 %v1294
    %v1358 = vpop.f32.mrf.mxu0
    %v1359 = vadd.f32 0.0, %v1358
    %1360 = vmatmul.f32.gmra.mxu0 %v1297
    %v1361 = vpop.f32.mrf.mxu0
    %v1362 = vadd.f32 0.0, %v1361
    %1363 = vmatmul.f32.gmra.mxu0 %v1300
    %v1364 = vpop.f32.mrf.mxu0
    %v1365 = vadd.f32 0.0, %v1364
    %1366 = vmatmul.f32.gmra.mxu0 %v1303
    %v1367 = vpop.f32.mrf.mxu0
    %v1368 = vadd.f32 0.0, %v1367
    %1369 = vmatmul.f32.gmra.mxu0 %v1306
    %v1370 = vpop.f32.mrf.mxu0
    %v1371 = vadd.f32 0.0, %v1370
    %1372 = vmatmul.f32.gmra.mxu0 %v1309
    %v1373 = vpop.f32.mrf.mxu0
    %v1374 = vadd.f32 0.0, %v1373
    %1375 = vmatmul.f32.gmra.mxu0 %v1312
    %v1376 = vpop.f32.mrf.mxu0
    %v1377 = vadd.f32 0.0, %v1376
    %1378 = vmatmul.f32.gmra.mxu0 %v1315
    %v1379 = vpop.f32.mrf.mxu0
    %v1380 = vadd.f32 0.0, %v1379
    %1381 = vmatmul.f32.gmra.mxu0 %v1318
    %v1382 = vpop.f32.mrf.mxu0
    %v1383 = vadd.f32 0.0, %v1382
    %1384 = vmatmul.f32.gmra.mxu0 %v1321
    %v1385 = vpop.f32.mrf.mxu0
    %v1386 = vadd.f32 0.0, %v1385
    %1387 = vmatmul.f32.gmra.mxu0 %v1324
    %v1388 = vpop.f32.mrf.mxu0
    %v1389 = vadd.f32 0.0, %v1388
    %1390 = vmatmul.f32.gmra.mxu0 %v1327
    %v1391 = vpop.f32.mrf.mxu0
    %v1392 = vadd.f32 0.0, %v1391
    %1393 = vmatmul.f32.gmra.mxu0 %v1330
    %v1394 = vpop.f32.mrf.mxu0
    %v1395 = vadd.f32 0.0, %v1394
    %1396 = vdwg.mxu0
    %1413 = vrot.lane.b32.xlu0 %v1350, 64
    %v1414 = vpop.permute.xlu0 %1413
    %1415 = vrot.lane.b32.xlu0 %v1353, 64
    %v1416 = vpop.permute.xlu0 %1415
    %1417 = vrot.lane.b32.xlu0 %v1356, 64
    %v1418 = vpop.permute.xlu0 %1417
    %1419 = vrot.lane.b32.xlu0 %v1359, 64
    %v1420 = vpop.permute.xlu0 %1419
    %1421 = vrot.lane.b32.xlu0 %v1362, 64
    %v1422 = vpop.permute.xlu0 %1421
    %1423 = vrot.lane.b32.xlu0 %v1365, 64
    %v1424 = vpop.permute.xlu0 %1423
    %1425 = vrot.lane.b32.xlu0 %v1368, 64
    %v1426 = vpop.permute.xlu0 %1425
    %1427 = vrot.lane.b32.xlu0 %v1371, 64
    %v1428 = vpop.permute.xlu0 %1427
    %1429 = vrot.lane.b32.xlu0 %v1374, 64
    %v1430 = vpop.permute.xlu0 %1429
    %1431 = vrot.lane.b32.xlu0 %v1377, 64
    %v1432 = vpop.permute.xlu0 %1431
    %1433 = vrot.lane.b32.xlu0 %v1380, 64
    %v1434 = vpop.permute.xlu0 %1433
    %1435 = vrot.lane.b32.xlu0 %v1383, 64
    %v1436 = vpop.permute.xlu0 %1435
    %1437 = vrot.lane.b32.xlu0 %v1386, 64
    %v1438 = vpop.permute.xlu0 %1437
    %1439 = vrot.lane.b32.xlu0 %v1389, 64
    %v1440 = vpop.permute.xlu0 %1439
    %1441 = vrot.lane.b32.xlu0 %v1392, 64
    %v1442 = vpop.permute.xlu0 %1441
    %1443 = vrot.lane.b32.xlu0 %v1395, 64
    %v1444 = vpop.permute.xlu0 %1443
    %v1461 = vadd.f32 %v706, %v1414
    %v1462 = vadd.f32 %v709, %v1416
    %v1463 = vadd.f32 %v712, %v1418
    %v1464 = vadd.f32 %v715, %v1420
    %v1465 = vadd.f32 %v718, %v1422
    %v1466 = vadd.f32 %v721, %v1424
    %v1467 = vadd.f32 %v724, %v1426
    %v1468 = vadd.f32 %v727, %v1428
    %v1469 = vadd.f32 %v730, %v1430
    %v1470 = vadd.f32 %v733, %v1432
    %v1471 = vadd.f32 %v736, %v1434
    %v1472 = vadd.f32 %v739, %v1436
    %v1473 = vadd.f32 %v742, %v1438
    %v1474 = vadd.f32 %v745, %v1440
    %v1475 = vadd.f32 %v748, %v1442
    %v1476 = vadd.f32 %v751, %v1444
    %v1477 = vperm.slane %v388, 0
    %1479 = vrot.lane.b32.xlu0 %v1477, 64
    %v1480 = vpop.permute.xlu0 %1479
    %v1482 = vadd.f32 %v1461, %v1480
    %v1483 = vadd.f32 %v1462, %v1480
    %v1484 = vadd.f32 %v1463, %v1480
    %v1485 = vadd.f32 %v1464, %v1480
    %v1486 = vadd.f32 %v1465, %v1480
    %v1487 = vadd.f32 %v1466, %v1480
    %v1488 = vadd.f32 %v1467, %v1480
    %v1489 = vadd.f32 %v1468, %v1480
    %v1490 = vadd.f32 %v1469, %v1480
    %v1491 = vadd.f32 %v1470, %v1480
    %v1492 = vadd.f32 %v1471, %v1480
    %v1493 = vadd.f32 %v1472, %v1480
    %v1494 = vadd.f32 %v1473, %v1480
    %v1495 = vadd.f32 %v1474, %v1480
    %v1496 = vadd.f32 %v1475, %v1480
    %v1497 = vadd.f32 %v1476, %v1480
    %v1498 = vtanh.pop %v1482
    %v1499 = vtanh.pop %v1483
    %v1500 = vtanh.pop %v1484
    %v1501 = vtanh.pop %v1485
    %v1502 = vtanh.pop %v1486
    %v1503 = vtanh.pop %v1487
    %v1504 = vtanh.pop %v1488
    %v1505 = vtanh.pop %v1489
    %v1506 = vtanh.pop %v1490
    %v1507 = vtanh.pop %v1491
    %v1508 = vtanh.pop %v1492
    %v1509 = vtanh.pop %v1493
    %v1510 = vtanh.pop %v1494
    %v1511 = vtanh.pop %v1495
    %v1512 = vtanh.pop %v1496
    %v1513 = vtanh.pop %v1497
    %v1514 = vmul.f32 %v978, %v475
    %v1515 = vmul.f32 %v993, %v478
    %v1516 = vmul.f32 %v1008, %v481
    %v1517 = vmul.f32 %v1023, %v484
    %v1518 = vmul.f32 %v1038, %v487
    %v1519 = vmul.f32 %v1053, %v490
    %v1520 = vmul.f32 %v1068, %v493
    %v1521 = vmul.f32 %v1083, %v496
    %v1522 = vmul.f32 %v1098, %v499
    %v1523 = vmul.f32 %v1113, %v502
    %v1524 = vmul.f32 %v1128, %v505
    %v1525 = vmul.f32 %v1143, %v508
    %v1526 = vmul.f32 %v1158, %v511
    %v1527 = vmul.f32 %v1173, %v514
    %v1528 = vmul.f32 %v1188, %v517
    %v1529 = vmul.f32 %v1203, %v520
    %v1530 = vsub.f32 1.0, %v978
    %v1531 = vsub.f32 1.0, %v993
    %v1532 = vsub.f32 1.0, %v1008
    %v1533 = vsub.f32 1.0, %v1023
    %v1534 = vsub.f32 1.0, %v1038
    %v1535 = vsub.f32 1.0, %v1053
    %v1536 = vsub.f32 1.0, %v1068
    %v1537 = vsub.f32 1.0, %v1083
    %v1538 = vsub.f32 1.0, %v1098
    %v1539 = vsub.f32 1.0, %v1113
    %v1540 = vsub.f32 1.0, %v1128
    %v1541 = vsub.f32 1.0, %v1143
    %v1542 = vsub.f32 1.0, %v1158
    %v1543 = vsub.f32 1.0, %v1173
    %v1544 = vsub.f32 1.0, %v1188
    %v1545 = vsub.f32 1.0, %v1203
    %1562 = vrot.lane.b32.xlu0 %v1498, 64
    %v1563 = vpop.permute.xlu0 %1562
    %1564 = vrot.lane.b32.xlu0 %v1499, 64
    %v1565 = vpop.permute.xlu0 %1564
    %1566 = vrot.lane.b32.xlu0 %v1500, 64
    %v1567 = vpop.permute.xlu0 %1566
    %1568 = vrot.lane.b32.xlu0 %v1501, 64
    %v1569 = vpop.permute.xlu0 %1568
    %1570 = vrot.lane.b32.xlu0 %v1502, 64
    %v1571 = vpop.permute.xlu0 %1570
    %1572 = vrot.lane.b32.xlu0 %v1503, 64
    %v1573 = vpop.permute.xlu0 %1572
    %1574 = vrot.lane.b32.xlu0 %v1504, 64
    %v1575 = vpop.permute.xlu0 %1574
    %1576 = vrot.lane.b32.xlu0 %v1505, 64
    %v1577 = vpop.permute.xlu0 %1576
    %1578 = vrot.lane.b32.xlu0 %v1506, 64
    %v1579 = vpop.permute.xlu0 %1578
    %1580 = vrot.lane.b32.xlu0 %v1507, 64
    %v1581 = vpop.permute.xlu0 %1580
    %1582 = vrot.lane.b32.xlu0 %v1508, 64
    %v1583 = vpop.permute.xlu0 %1582
    %1584 = vrot.lane.b32.xlu0 %v1509, 64
    %v1585 = vpop.permute.xlu0 %1584
    %1586 = vrot.lane.b32.xlu0 %v1510, 64
    %v1587 = vpop.permute.xlu0 %1586
    %1588 = vrot.lane.b32.xlu0 %v1511, 64
    %v1589 = vpop.permute.xlu0 %1588
    %1590 = vrot.lane.b32.xlu0 %v1512, 64
    %v1591 = vpop.permute.xlu0 %1590
    %1592 = vrot.lane.b32.xlu0 %v1513, 64
    %v1593 = vpop.permute.xlu0 %1592
    %v1610 = vmul.f32 %v1530, %v1563
    %v1611 = vmul.f32 %v1531, %v1565
    %v1612 = vmul.f32 %v1532, %v1567
    %v1613 = vmul.f32 %v1533, %v1569
    %v1614 = vmul.f32 %v1534, %v1571
    %v1615 = vmul.f32 %v1535, %v1573
    %v1616 = vmul.f32 %v1536, %v1575
    %v1617 = vmul.f32 %v1537, %v1577
    %v1618 = vmul.f32 %v1538, %v1579
    %v1619 = vmul.f32 %v1539, %v1581
    %v1620 = vmul.f32 %v1540, %v1583
    %v1621 = vmul.f32 %v1541, %v1585
    %v1622 = vmul.f32 %v1542, %v1587
    %v1623 = vmul.f32 %v1543, %v1589
    %v1624 = vmul.f32 %v1544, %v1591
    %v1625 = vmul.f32 %v1545, %v1593
    %v1626 = vadd.f32 %v1514, %v1610
    %v1627 = vadd.f32 %v1515, %v1611
    %v1628 = vadd.f32 %v1516, %v1612
    %v1629 = vadd.f32 %v1517, %v1613
    %v1630 = vadd.f32 %v1518, %v1614
    %v1631 = vadd.f32 %v1519, %v1615
    %v1632 = vadd.f32 %v1520, %v1616
    %v1633 = vadd.f32 %v1521, %v1617
    %v1634 = vadd.f32 %v1522, %v1618
    %v1635 = vadd.f32 %v1523, %v1619
    %v1636 = vadd.f32 %v1524, %v1620
    %v1637 = vadd.f32 %v1525, %v1621
    %v1638 = vadd.f32 %v1526, %v1622
    %v1639 = vadd.f32 %v1527, %v1623
    %v1640 = vadd.f32 %v1528, %v1624
    %v1641 = vadd.f32 %v1529, %v1625
    %s1642 = sld [smem:[#allocation4]]
    %v1643 = vstv %s1642
    %v1644 = vmul.f32 %v1643, %v1626
    %v1645 = vmul.f32 %v1643, %v1627
    %s1646 = sld [smem:[#allocation4 + $0x1]]
    %v1647 = vstv %s1646
    %v1648 = vmul.f32 %v1647, %v1628
    %v1649 = vmul.f32 %v1647, %v1629
    %v1650 = vadd.f32 %v1644, %v1648
    %v1651 = vadd.f32 %v1645, %v1649
    %s1652 = sld [smem:[#allocation4 + $0x2]]
    %v1653 = vstv %s1652
    %v1654 = vmul.f32 %v1653, %v1630
    %v1655 = vmul.f32 %v1653, %v1631
    %v1656 = vadd.f32 %v1650, %v1654
    %v1657 = vadd.f32 %v1651, %v1655
    %s1658 = sld [smem:[#allocation4 + $0x3]]
    %v1659 = vstv %s1658
    %v1660 = vmul.f32 %v1659, %v1632
    %v1661 = vmul.f32 %v1659, %v1633
    %v1662 = vadd.f32 %v1656, %v1660
    %v1663 = vadd.f32 %v1657, %v1661
    %s1664 = sld [smem:[#allocation4 + $0x4]]
    %v1665 = vstv %s1664
    %v1666 = vmul.f32 %v1665, %v1634
    %v1667 = vmul.f32 %v1665, %v1635
    %v1668 = vadd.f32 %v1662, %v1666
    %v1669 = vadd.f32 %v1663, %v1667
    %s1670 = sld [smem:[#allocation4 + $0x5]]
    %v1671 = vstv %s1670
    %v1672 = vmul.f32 %v1671, %v1636
    %v1673 = vmul.f32 %v1671, %v1637
    %v1674 = vadd.f32 %v1668, %v1672
    %v1675 = vadd.f32 %v1669, %v1673
    %s1676 = sld [smem:[#allocation4 + $0x6]]
    %v1677 = vstv %s1676
    %v1678 = vmul.f32 %v1677, %v1638
    %v1679 = vmul.f32 %v1677, %v1639
    %v1680 = vadd.f32 %v1674, %v1678
    %v1681 = vadd.f32 %v1675, %v1679
    %s1682 = sld [smem:[#allocation4 + $0x7]]
    %v1683 = vstv %s1682
    %v1684 = vmul.f32 %v1683, %v1640
    %v1685 = vmul.f32 %v1683, %v1641
    %v1686 = vadd.f32 %v1680, %v1684
    %v1687 = vadd.f32 %v1681, %v1685
    %1688 = vst.msk [vmem:[#allocation7] sm:$0xff] %vm753, %v1686
    %1689 = vst.msk [vmem:[#allocation7 + $0x8] sm:$0xff] %vm753, %v1687
    // Predicated region
    $region26: #{conv_stacked_a3tgcn.1} parent=1 // pred_check
      _
    $region27: #{conv_stacked_a3tgcn.1} parent=1 // pred_check_branch
      %1691 = sbr.rel (0) target = $region29
    $region28: #{conv_stacked_a3tgcn.1} parent=1 // pred_region
      %1693 = vsyncadd [#allocation5], 0
      %s1694 = sshll.u32 [#allocation7], 4
      %s1695 = int_to_ptr.vmem [resolvable:$true] %s1694
      %s1696 = sshll.u32 %s5, 4
      %s1697 = int_to_ptr.hbm [resolvable:$true] %s1696
      %1702 = dma.vmem_to_hbm [thread:$0]  %s1695, 256, %s1697, [#allocation5], 128, 128, 8
    $region29: #{conv_stacked_a3tgcn.1} parent=1 // pred_fallthru
      _
    // Predicated region
    $region30: #{conv_stacked_a3tgcn.1} parent=1 // pred_check
      _
    $region31: #{conv_stacked_a3tgcn.1} parent=1 // pred_check_branch
      %1704 = sbr.rel (0) target = $region33
    $region32: #{conv_stacked_a3tgcn.1} parent=1 // pred_region
      %1706 = dma.done [#allocation5], 256
    $region33: #{conv_stacked_a3tgcn.1} parent=1 // pred_fallthru
      _
    %1707 = vsyncpa [#allocation5], 1
    %1708 = vsyncpa [#allocation6], 1

</llo_original>
